<compile_context>
chip_gen: v5e
topology: v5e:2x2
jax: 0.10.0
libtpu: 0.0.40
codegen_flags: <defaults>
</compile_context>

<pallas_src>
import functools
import math

import jax
import jax.numpy as jnp
from jax.experimental import pallas as pl
from jax.experimental.pallas import tpu as pltpu  # noqa: F401  (TPU backend)


def _full_spec(shape):
    """Whole-array block (grid=()) BlockSpec."""
    return pl.BlockSpec(shape, lambda: (0,) * len(shape))


# ----------------------------------------------------------------------------
# In-kernel helpers (traced inline; everything stays in VMEM / vregs).
# ----------------------------------------------------------------------------
def _row_sums_as_row(mat):
    """Row-wise sum of `mat` presented lane-dense as a (1, rows) row (1-row dot, no transpose)."""
    ones = jnp.ones((1, mat.shape[1]), jnp.float32)
    return jax.lax.dot_general(ones, mat, (((1,), (1,)), ((), ())),
                               preferred_element_type=jnp.float32)


def _topk_select(score_row, k, sel_ref):
    """Iterative masked-argmax top-k on a lane-dense (1, n) score row.

    Writes k one-hot rows into sel_ref (k, n) (static sublane-slice stores) and
    returns the full (k, n) selection matrix. Ties break toward the lowest index.
    """
    n = score_row.shape[1]
    col = jax.lax.broadcasted_iota(jnp.int32, (1, n), 1)
    cur = score_row
    for i in range(k):                                   # k is tiny (<= 8): fully unrolled
        m = jnp.max(cur, axis=-1, keepdims=True)
        idx = jnp.min(jnp.where(cur == m, col, n), axis=-1, keepdims=True)
        onehot = (col == idx).astype(jnp.float32)        # (1, n)
        sel_ref[i:i + 1, :] = onehot
        cur = jnp.where(onehot > 0.0, -jnp.inf, cur)     # mask the chosen lane
    return sel_ref[...]


def _gather_pooled(sel, adj, x):
    """One-hot selection matmul gather: x_p = P x, a_p = P A P^T."""
    x_p = jnp.dot(sel, x, preferred_element_type=jnp.float32)
    tmp = jnp.dot(sel, adj, preferred_element_type=jnp.float32)
    a_p = jax.lax.dot_general(tmp, sel, (((1,), (1,)), ((), ())),
                              preferred_element_type=jnp.float32)
    return x_p, a_p


def _structure_learning(x_p, a_p, asrc, adst, lamb):
    """Dense HGP-SL attention: row-softmax(relu(x_i.a_src + x_j.a_dst) + lamb*A_ij)."""
    s_src = jnp.sum(x_p * asrc, axis=-1, keepdims=True)               # (k, 1)  VPU mul+reduce
    s_dst = jax.lax.dot_general(adst, x_p, (((1,), (1,)), ((), ())),
                                preferred_element_type=jnp.float32)   # (1, k)  1-row dot
    logits = jnp.maximum(s_src + s_dst, 0.0) + lamb * a_p
    m = jnp.max(logits, axis=-1, keepdims=True)
    p = jnp.exp(logits - m)
    return p / jnp.sum(p, axis=-1, keepdims=True)


def _gcn_relu(e, x_p, w, b):
    """relu(D^-1/2 E D^-1/2 X W + b) on the pooled graph; also returns inv_deg."""
    deg = jnp.sum(e, axis=-1, keepdims=True)
    norm = jnp.where(deg > 0.0, jax.lax.rsqrt(jnp.maximum(deg, 1e-12)), 0.0)
    agg = jnp.dot(e, x_p * norm, preferred_element_type=jnp.float32) * norm
    h = jnp.maximum(jnp.dot(agg, w, preferred_element_type=jnp.float32) + b, 0.0)
    inv_deg = jnp.where(deg > 0.0, 1.0 / deg, 0.0)
    return h, inv_deg


# ----------------------------------------------------------------------------
# The single fused forward kernel.
# ----------------------------------------------------------------------------
def _simple_model_kernel(a_ref, x_ref,
                         wc1_ref, bc1_ref, wc2_ref, bc2_ref, wc3_ref, bc3_ref,
                         p1s_ref, p1d_ref, p2s_ref, p2d_ref,
                         w1_ref, b1_ref, w2_ref, b2_ref, w3_ref, b3_ref,
                         o_ref, sel1_ref, sel2_ref, *, k1, k2, lamb):
    a = a_ref[...]

    # ---- stage 1: conv1 + relu + node information score (single read of A) ----
    deg = jnp.sum(a, axis=-1, keepdims=True)
    norm = jnp.where(deg > 0.0, jax.lax.rsqrt(jnp.maximum(deg, 1e-12)), 0.0)
    inv_deg = jnp.where(deg > 0.0, 1.0 / deg, 0.0)
    agg = jnp.dot(a, x_ref[...] * norm, preferred_element_type=jnp.float32) * norm
    h1 = jnp.maximum(jnp.dot(agg, wc1_ref[...], preferred_element_type=jnp.float32)
                     + bc1_ref[...], 0.0)
    nbr1 = jnp.dot(a, h1, preferred_element_type=jnp.float32) * inv_deg
    score1 = _row_sums_as_row(jnp.abs(h1 - nbr1))                     # lane-dense (1, n)

    # ---- pool1: in-kernel top-k + one-hot gather + structure learning + readout1 ----
    sel1 = _topk_select(score1, k1, sel1_ref)                         # (k1, n)
    x_p1, a_p1 = _gather_pooled(sel1, a, h1)
    e1 = _structure_learning(x_p1, a_p1, p1s_ref[...], p1d_ref[...], lamb)
    r_avg = jnp.mean(x_p1, axis=0, keepdims=True)
    r_max = jnp.max(x_p1, axis=0, keepdims=True)

    # ---- conv2 + relu + next-level information score ----
    h2, inv_deg2 = _gcn_relu(e1, x_p1, wc2_ref[...], bc2_ref[...])
    nbr2 = jnp.dot(e1, h2, preferred_element_type=jnp.float32) * inv_deg2
    score2 = _row_sums_as_row(jnp.abs(h2 - nbr2))                     # lane-dense (1, k1)

    # ---- pool2 + readout2 ----
    sel2 = _topk_select(score2, k2, sel2_ref)                         # (k2, k1)
    x_p2, a_p2 = _gather_pooled(sel2, e1, h2)
    e2 = _structure_learning(x_p2, a_p2, p2s_ref[...], p2d_ref[...], lamb)
    r_avg = r_avg + jnp.mean(x_p2, axis=0, keepdims=True)
    r_max = r_max + jnp.max(x_p2, axis=0, keepdims=True)

    # ---- conv3 + relu + readout3 ----
    h3, _ = _gcn_relu(e2, x_p2, wc3_ref[...], bc3_ref[...])
    r_avg = r_avg + jnp.mean(h3, axis=0, keepdims=True)
    r_max = r_max + jnp.max(h3, axis=0, keepdims=True)

    # ---- MLP head: lin1 over [avg | max] as split matmuls (no lane concat), relu,
    #      lin2, relu, lin3, log_softmax.  Dropout p = 0.0 -> identity. ----
    f = r_avg.shape[1]
    z1 = (jnp.dot(r_avg, w1_ref[:f, :], preferred_element_type=jnp.float32)
          + jnp.dot(r_max, w1_ref[f:, :], preferred_element_type=jnp.float32)
          + b1_ref[...])
    z1 = jnp.maximum(z1, 0.0)
    z2 = jnp.maximum(jnp.dot(z1, w2_ref[...], preferred_element_type=jnp.float32)
                     + b2_ref[...], 0.0)
    z3 = jnp.dot(z2, w3_ref[...], preferred_element_type=jnp.float32) + b3_ref[...]
    zs = z3 - jnp.max(z3, axis=-1, keepdims=True)
    o_ref[...] = zs - jnp.log(jnp.sum(jnp.exp(zs), axis=-1, keepdims=True))


# ----------------------------------------------------------------------------
# Full forward pass (mirrors SimpleModel.forward) — one pallas_call.
# ----------------------------------------------------------------------------
def simple_model_forward(adj, x, params, *, pool_ratio=0.5, lamb=1.0):
    n = x.shape[0]
    k1 = max(1, int(math.ceil(pool_ratio * n)))
    k2 = max(1, int(math.ceil(pool_ratio * k1)))
    out_feat = params["w_l3"].shape[1]

    args = (adj, x,
            params["w_c1"], params["b_c1"], params["w_c2"], params["b_c2"],
            params["w_c3"], params["b_c3"],
            params["p1_src"], params["p1_dst"], params["p2_src"], params["p2_dst"],
            params["w_l1"], params["b_l1"], params["w_l2"], params["b_l2"],
            params["w_l3"], params["b_l3"])

    return pl.pallas_call(
        functools.partial(_simple_model_kernel, k1=k1, k2=k2, lamb=lamb),
        out_shape=jax.ShapeDtypeStruct((1, out_feat), jnp.float32),
        in_specs=[_full_spec(a.shape) for a in args],
        out_specs=_full_spec((1, out_feat)),
        scratch_shapes=[pltpu.VMEM((k1, n), jnp.float32),     # one-hot selection, pool1
                        pltpu.VMEM((k2, k1), jnp.float32)],   # one-hot selection, pool2
    )(*args)


def init_params(key, in_feat, hid_feat, out_feat):
    ks = jax.random.split(key, 10)

    def lin(k, fan_in, shape):
        s = 1.0 / jnp.sqrt(jnp.float32(fan_in))
        return jax.random.uniform(k, shape, jnp.float32, -s, s)

    return {
        "w_c1": lin(ks[0], in_feat, (in_feat, hid_feat)),
        "b_c1": jnp.zeros((1, hid_feat), jnp.float32),
        "w_c2": lin(ks[1], hid_feat, (hid_feat, hid_feat)),
        "b_c2": jnp.zeros((1, hid_feat), jnp.float32),
        "w_c3": lin(ks[2], hid_feat, (hid_feat, hid_feat)),
        "b_c3": jnp.zeros((1, hid_feat), jnp.float32),
        # HGP-SL attention vectors, stored lane-major as (1, hid) rows (no transposes needed).
        "p1_src": lin(ks[3], hid_feat, (1, hid_feat)),
        "p1_dst": lin(ks[4], hid_feat, (1, hid_feat)),
        "p2_src": lin(ks[5], hid_feat, (1, hid_feat)),
        "p2_dst": lin(ks[6], hid_feat, (1, hid_feat)),
        "w_l1": lin(ks[7], 2 * hid_feat, (2 * hid_feat, hid_feat)),
        "b_l1": jnp.zeros((1, hid_feat), jnp.float32),
        "w_l2": lin(ks[8], hid_feat, (hid_feat, hid_feat // 2)),
        "b_l2": jnp.zeros((1, hid_feat // 2), jnp.float32),
        "w_l3": lin(ks[9], hid_feat // 2, (hid_feat // 2, out_feat)),
        "b_l3": jnp.zeros((1, out_feat), jnp.float32),
    }


if __name__ == "__main__":
    IN_FEAT, HID_FEAT, OUT_FEAT = 8, 32, 4
    N_NODES = 16

    key = jax.random.PRNGKey(0)
    k_feat, k_param = jax.random.split(key)

    # Deterministic synthetic graph: ring + half-way chords (symmetric, unit weights).
    idx = jnp.arange(N_NODES)
    adj = jnp.zeros((N_NODES, N_NODES), jnp.float32)
    adj = adj.at[idx, (idx + 1) % N_NODES].set(1.0)
    adj = adj.at[idx, (idx - 1) % N_NODES].set(1.0)
    adj = adj.at[idx, (idx + N_NODES // 2) % N_NODES].set(1.0)

    x = jax.random.normal(k_feat, (N_NODES, IN_FEAT), jnp.float32)
    params = init_params(k_param, IN_FEAT, HID_FEAT, OUT_FEAT)

    fwd = jax.jit(functools.partial(simple_model_forward, pool_ratio=0.5, lamb=1.0))
    out = jax.block_until_ready(fwd(adj, x, params))

    assert out.shape == (1, OUT_FEAT)
    assert bool(jnp.all(jnp.isfinite(out)))
    # log_softmax row sums (in prob space) to ~1
    assert abs(float(jnp.sum(jnp.exp(out))) - 1.0) < 1e-4
    print("KERNEL_OK")
</pallas_src>

<mosaic_0001>
module attributes {stable_mosaic.version = 11 : i64} {
  func.func @_simple_model_kernel(%arg0: memref<16x16xf32, #tpu.memory_space<vmem>>, %arg1: memref<16x8xf32, #tpu.memory_space<vmem>>, %arg2: memref<8x32xf32, #tpu.memory_space<vmem>>, %arg3: memref<1x32xf32, #tpu.memory_space<vmem>>, %arg4: memref<32x32xf32, #tpu.memory_space<vmem>>, %arg5: memref<1x32xf32, #tpu.memory_space<vmem>>, %arg6: memref<32x32xf32, #tpu.memory_space<vmem>>, %arg7: memref<1x32xf32, #tpu.memory_space<vmem>>, %arg8: memref<1x32xf32, #tpu.memory_space<vmem>>, %arg9: memref<1x32xf32, #tpu.memory_space<vmem>>, %arg10: memref<1x32xf32, #tpu.memory_space<vmem>>, %arg11: memref<1x32xf32, #tpu.memory_space<vmem>>, %arg12: memref<64x32xf32, #tpu.memory_space<vmem>>, %arg13: memref<1x32xf32, #tpu.memory_space<vmem>>, %arg14: memref<32x16xf32, #tpu.memory_space<vmem>>, %arg15: memref<1x16xf32, #tpu.memory_space<vmem>>, %arg16: memref<16x4xf32, #tpu.memory_space<vmem>>, %arg17: memref<1x4xf32, #tpu.memory_space<vmem>>, %arg18: memref<1x4xf32, #tpu.memory_space<vmem>>, %arg19: memref<8x16xf32, #tpu.memory_space<vmem>>, %arg20: memref<4x8xf32, #tpu.memory_space<vmem>>) attributes {dimension_semantics = [], scalar_prefetch = 0 : i64, scratch_operands = 2 : i64, tpu.core_type = #tpu.core_type<tc>} {
    %c0 = arith.constant 0 : index
    %c0_0 = arith.constant 0 : index
    %0 = vector.load %arg0[%c0, %c0_0] : memref<16x16xf32, #tpu.memory_space<vmem>>, vector<16x16xf32>
    %cst = arith.constant dense<0.000000e+00> : vector<16xf32>
    %1 = vector.multi_reduction <add>, %0, %cst [1] : vector<16x16xf32> to vector<16xf32>
    %2 = vector.shape_cast %1 : vector<16xf32> to vector<16x1xf32>
    %cst_1 = arith.constant 0.000000e+00 : f32
    %3 = vector.broadcast %cst_1 : f32 to vector<16x1xf32>
    %4 = arith.cmpf ogt, %2, %3 : vector<16x1xf32>
    %cst_2 = arith.constant 9.99999996E-13 : f32
    %5 = vector.broadcast %cst_2 : f32 to vector<16x1xf32>
    %6 = arith.maximumf %2, %5 : vector<16x1xf32>
    %7 = math.rsqrt %6 : vector<16x1xf32>
    %cst_3 = arith.constant 0.000000e+00 : f32
    %8 = vector.broadcast %cst_3 : f32 to vector<16x1xf32>
    %9 = arith.select %4, %7, %8 : vector<16x1xi1>, vector<16x1xf32>
    %cst_4 = arith.constant 0.000000e+00 : f32
    %10 = vector.broadcast %cst_4 : f32 to vector<16x1xf32>
    %11 = arith.cmpf ogt, %2, %10 : vector<16x1xf32>
    %cst_5 = arith.constant 1.000000e+00 : f32
    %12 = vector.broadcast %cst_5 : f32 to vector<16x1xf32>
    %13 = arith.divf %12, %2 : vector<16x1xf32>
    %cst_6 = arith.constant 0.000000e+00 : f32
    %14 = vector.broadcast %cst_6 : f32 to vector<16x1xf32>
    %15 = arith.select %11, %13, %14 : vector<16x1xi1>, vector<16x1xf32>
    %c0_7 = arith.constant 0 : index
    %c0_8 = arith.constant 0 : index
    %16 = vector.load %arg1[%c0_7, %c0_8] : memref<16x8xf32, #tpu.memory_space<vmem>>, vector<16x8xf32>
    %17 = vector.broadcast %9 : vector<16x1xf32> to vector<16x8xf32>
    %18 = arith.mulf %16, %17 : vector<16x8xf32>
    %cst_9 = arith.constant dense<0.000000e+00> : vector<16x8xf32>
    %19 = tpu.matmul %0, %18, %cst_9 {dimension_numbers = #tpu.dot_dimension_numbers<[1], [0], [0], [1], [0, 0, 1, 1], [], []>} : vector<16x16xf32>, vector<16x8xf32>, vector<16x8xf32> -> vector<16x8xf32>
    %20 = vector.broadcast %9 : vector<16x1xf32> to vector<16x8xf32>
    %21 = arith.mulf %19, %20 : vector<16x8xf32>
    %c0_10 = arith.constant 0 : index
    %c0_11 = arith.constant 0 : index
    %22 = vector.load %arg2[%c0_10, %c0_11] : memref<8x32xf32, #tpu.memory_space<vmem>>, vector<8x32xf32>
    %cst_12 = arith.constant dense<0.000000e+00> : vector<16x32xf32>
    %23 = tpu.matmul %21, %22, %cst_12 {dimension_numbers = #tpu.dot_dimension_numbers<[1], [0], [0], [1], [0, 0, 1, 1], [], []>} : vector<16x8xf32>, vector<8x32xf32>, vector<16x32xf32> -> vector<16x32xf32>
    %c0_13 = arith.constant 0 : index
    %c0_14 = arith.constant 0 : index
    %24 = vector.load %arg3[%c0_13, %c0_14] : memref<1x32xf32, #tpu.memory_space<vmem>>, vector<1x32xf32>
    %25 = vector.broadcast %24 : vector<1x32xf32> to vector<16x32xf32>
    %26 = arith.addf %23, %25 : vector<16x32xf32>
    %cst_15 = arith.constant 0.000000e+00 : f32
    %27 = vector.broadcast %cst_15 : f32 to vector<16x32xf32>
    %28 = arith.maximumf %26, %27 : vector<16x32xf32>
    %cst_16 = arith.constant dense<0.000000e+00> : vector<16x32xf32>
    %29 = tpu.matmul %0, %28, %cst_16 {dimension_numbers = #tpu.dot_dimension_numbers<[1], [0], [0], [1], [0, 0, 1, 1], [], []>} : vector<16x16xf32>, vector<16x32xf32>, vector<16x32xf32> -> vector<16x32xf32>
    %30 = vector.broadcast %15 : vector<16x1xf32> to vector<16x32xf32>
    %31 = arith.mulf %29, %30 : vector<16x32xf32>
    %32 = arith.subf %28, %31 : vector<16x32xf32>
    %33 = math.absf %32 : vector<16x32xf32>
    %cst_17 = arith.constant 1.000000e+00 : f32
    %34 = vector.broadcast %cst_17 : f32 to vector<1x32xf32>
    %cst_18 = arith.constant dense<0.000000e+00> : vector<1x16xf32>
    %35 = tpu.matmul %34, %33, %cst_18 {dimension_numbers = #tpu.dot_dimension_numbers<[1], [1], [0], [0], [0, 0, 1, 0], [], []>} : vector<1x32xf32>, vector<16x32xf32>, vector<1x16xf32> -> vector<1x16xf32>
    %36 = tpu.iota {dimensions = array<i32: 1>} : vector<1x16xi32>
    %cst_19 = arith.constant dense<0xFF800000> : vector<1xf32>
    %37 = vector.multi_reduction <maximumf>, %35, %cst_19 [1] : vector<1x16xf32> to vector<1xf32>
    %38 = vector.shape_cast %37 : vector<1xf32> to vector<1x1xf32>
    %39 = vector.broadcast %38 : vector<1x1xf32> to vector<1x16xf32>
    %40 = arith.cmpf oeq, %35, %39 : vector<1x16xf32>
    %c16_i32 = arith.constant 16 : i32
    %41 = vector.broadcast %c16_i32 : i32 to vector<1x16xi32>
    %42 = arith.select %40, %36, %41 : vector<1x16xi1>, vector<1x16xi32>
    %cst_20 = arith.constant dense<2147483647> : vector<1xi32>
    %43 = vector.multi_reduction <minsi>, %42, %cst_20 [1] : vector<1x16xi32> to vector<1xi32>
    %44 = vector.shape_cast %43 : vector<1xi32> to vector<1x1xi32>
    %45 = vector.broadcast %44 : vector<1x1xi32> to vector<1x16xi32>
    %46 = arith.cmpi eq, %36, %45 : vector<1x16xi32>
    %47 = arith.extui %46 : vector<1x16xi1> to vector<1x16xi32>
    %48 = arith.sitofp %47 : vector<1x16xi32> to vector<1x16xf32>
    %c0_21 = arith.constant 0 : index
    %c0_22 = arith.constant 0 : index
    %49 = vector.load %arg19[%c0_21, %c0_22] : memref<8x16xf32, #tpu.memory_space<vmem>>, vector<1x16xf32>
    tpu.vector_store %arg19[%c0_21, %c0_22], %48 {strides = array<i32>} : memref<8x16xf32, #tpu.memory_space<vmem>>, vector<1x16xf32>,
    %cst_23 = arith.constant 0.000000e+00 : f32
    %50 = vector.broadcast %cst_23 : f32 to vector<1x16xf32>
    %51 = arith.cmpf ogt, %48, %50 : vector<1x16xf32>
    %cst_24 = arith.constant 0xFF800000 : f32
    %52 = vector.broadcast %cst_24 : f32 to vector<1x16xf32>
    %53 = arith.select %51, %52, %35 : vector<1x16xi1>, vector<1x16xf32>
    %cst_25 = arith.constant dense<0xFF800000> : vector<1xf32>
    %54 = vector.multi_reduction <maximumf>, %53, %cst_25 [1] : vector<1x16xf32> to vector<1xf32>
    %55 = vector.shape_cast %54 : vector<1xf32> to vector<1x1xf32>
    %56 = vector.broadcast %55 : vector<1x1xf32> to vector<1x16xf32>
    %57 = arith.cmpf oeq, %53, %56 : vector<1x16xf32>
    %c16_i32_26 = arith.constant 16 : i32
    %58 = vector.broadcast %c16_i32_26 : i32 to vector<1x16xi32>
    %59 = arith.select %57, %36, %58 : vector<1x16xi1>, vector<1x16xi32>
    %cst_27 = arith.constant dense<2147483647> : vector<1xi32>
    %60 = vector.multi_reduction <minsi>, %59, %cst_27 [1] : vector<1x16xi32> to vector<1xi32>
    %61 = vector.shape_cast %60 : vector<1xi32> to vector<1x1xi32>
    %62 = vector.broadcast %61 : vector<1x1xi32> to vector<1x16xi32>
    %63 = arith.cmpi eq, %36, %62 : vector<1x16xi32>
    %64 = arith.extui %63 : vector<1x16xi1> to vector<1x16xi32>
    %65 = arith.sitofp %64 : vector<1x16xi32> to vector<1x16xf32>
    %c1 = arith.constant 1 : index
    %c0_28 = arith.constant 0 : index
    %66 = vector.load %arg19[%c1, %c0_28] : memref<8x16xf32, #tpu.memory_space<vmem>>, vector<1x16xf32>
    tpu.vector_store %arg19[%c1, %c0_28], %65 {strides = array<i32>} : memref<8x16xf32, #tpu.memory_space<vmem>>, vector<1x16xf32>,
    %cst_29 = arith.constant 0.000000e+00 : f32
    %67 = vector.broadcast %cst_29 : f32 to vector<1x16xf32>
    %68 = arith.cmpf ogt, %65, %67 : vector<1x16xf32>
    %cst_30 = arith.constant 0xFF800000 : f32
    %69 = vector.broadcast %cst_30 : f32 to vector<1x16xf32>
    %70 = arith.select %68, %69, %53 : vector<1x16xi1>, vector<1x16xf32>
    %cst_31 = arith.constant dense<0xFF800000> : vector<1xf32>
    %71 = vector.multi_reduction <maximumf>, %70, %cst_31 [1] : vector<1x16xf32> to vector<1xf32>
    %72 = vector.shape_cast %71 : vector<1xf32> to vector<1x1xf32>
    %73 = vector.broadcast %72 : vector<1x1xf32> to vector<1x16xf32>
    %74 = arith.cmpf oeq, %70, %73 : vector<1x16xf32>
    %c16_i32_32 = arith.constant 16 : i32
    %75 = vector.broadcast %c16_i32_32 : i32 to vector<1x16xi32>
    %76 = arith.select %74, %36, %75 : vector<1x16xi1>, vector<1x16xi32>
    %cst_33 = arith.constant dense<2147483647> : vector<1xi32>
    %77 = vector.multi_reduction <minsi>, %76, %cst_33 [1] : vector<1x16xi32> to vector<1xi32>
    %78 = vector.shape_cast %77 : vector<1xi32> to vector<1x1xi32>
    %79 = vector.broadcast %78 : vector<1x1xi32> to vector<1x16xi32>
    %80 = arith.cmpi eq, %36, %79 : vector<1x16xi32>
    %81 = arith.extui %80 : vector<1x16xi1> to vector<1x16xi32>
    %82 = arith.sitofp %81 : vector<1x16xi32> to vector<1x16xf32>
    %c2 = arith.constant 2 : index
    %c0_34 = arith.constant 0 : index
    %83 = vector.load %arg19[%c2, %c0_34] : memref<8x16xf32, #tpu.memory_space<vmem>>, vector<1x16xf32>
    tpu.vector_store %arg19[%c2, %c0_34], %82 {strides = array<i32>} : memref<8x16xf32, #tpu.memory_space<vmem>>, vector<1x16xf32>,
    %cst_35 = arith.constant 0.000000e+00 : f32
    %84 = vector.broadcast %cst_35 : f32 to vector<1x16xf32>
    %85 = arith.cmpf ogt, %82, %84 : vector<1x16xf32>
    %cst_36 = arith.constant 0xFF800000 : f32
    %86 = vector.broadcast %cst_36 : f32 to vector<1x16xf32>
    %87 = arith.select %85, %86, %70 : vector<1x16xi1>, vector<1x16xf32>
    %cst_37 = arith.constant dense<0xFF800000> : vector<1xf32>
    %88 = vector.multi_reduction <maximumf>, %87, %cst_37 [1] : vector<1x16xf32> to vector<1xf32>
    %89 = vector.shape_cast %88 : vector<1xf32> to vector<1x1xf32>
    %90 = vector.broadcast %89 : vector<1x1xf32> to vector<1x16xf32>
    %91 = arith.cmpf oeq, %87, %90 : vector<1x16xf32>
    %c16_i32_38 = arith.constant 16 : i32
    %92 = vector.broadcast %c16_i32_38 : i32 to vector<1x16xi32>
    %93 = arith.select %91, %36, %92 : vector<1x16xi1>, vector<1x16xi32>
    %cst_39 = arith.constant dense<2147483647> : vector<1xi32>
    %94 = vector.multi_reduction <minsi>, %93, %cst_39 [1] : vector<1x16xi32> to vector<1xi32>
    %95 = vector.shape_cast %94 : vector<1xi32> to vector<1x1xi32>
    %96 = vector.broadcast %95 : vector<1x1xi32> to vector<1x16xi32>
    %97 = arith.cmpi eq, %36, %96 : vector<1x16xi32>
    %98 = arith.extui %97 : vector<1x16xi1> to vector<1x16xi32>
    %99 = arith.sitofp %98 : vector<1x16xi32> to vector<1x16xf32>
    %c3 = arith.constant 3 : index
    %c0_40 = arith.constant 0 : index
    %100 = vector.load %arg19[%c3, %c0_40] : memref<8x16xf32, #tpu.memory_space<vmem>>, vector<1x16xf32>
    tpu.vector_store %arg19[%c3, %c0_40], %99 {strides = array<i32>} : memref<8x16xf32, #tpu.memory_space<vmem>>, vector<1x16xf32>,
    %cst_41 = arith.constant 0.000000e+00 : f32
    %101 = vector.broadcast %cst_41 : f32 to vector<1x16xf32>
    %102 = arith.cmpf ogt, %99, %101 : vector<1x16xf32>
    %cst_42 = arith.constant 0xFF800000 : f32
    %103 = vector.broadcast %cst_42 : f32 to vector<1x16xf32>
    %104 = arith.select %102, %103, %87 : vector<1x16xi1>, vector<1x16xf32>
    %cst_43 = arith.constant dense<0xFF800000> : vector<1xf32>
    %105 = vector.multi_reduction <maximumf>, %104, %cst_43 [1] : vector<1x16xf32> to vector<1xf32>
    %106 = vector.shape_cast %105 : vector<1xf32> to vector<1x1xf32>
    %107 = vector.broadcast %106 : vector<1x1xf32> to vector<1x16xf32>
    %108 = arith.cmpf oeq, %104, %107 : vector<1x16xf32>
    %c16_i32_44 = arith.constant 16 : i32
    %109 = vector.broadcast %c16_i32_44 : i32 to vector<1x16xi32>
    %110 = arith.select %108, %36, %109 : vector<1x16xi1>, vector<1x16xi32>
    %cst_45 = arith.constant dense<2147483647> : vector<1xi32>
    %111 = vector.multi_reduction <minsi>, %110, %cst_45 [1] : vector<1x16xi32> to vector<1xi32>
    %112 = vector.shape_cast %111 : vector<1xi32> to vector<1x1xi32>
    %113 = vector.broadcast %112 : vector<1x1xi32> to vector<1x16xi32>
    %114 = arith.cmpi eq, %36, %113 : vector<1x16xi32>
    %115 = arith.extui %114 : vector<1x16xi1> to vector<1x16xi32>
    %116 = arith.sitofp %115 : vector<1x16xi32> to vector<1x16xf32>
    %c4 = arith.constant 4 : index
    %c0_46 = arith.constant 0 : index
    %117 = vector.load %arg19[%c4, %c0_46] : memref<8x16xf32, #tpu.memory_space<vmem>>, vector<1x16xf32>
    tpu.vector_store %arg19[%c4, %c0_46], %116 {strides = array<i32>} : memref<8x16xf32, #tpu.memory_space<vmem>>, vector<1x16xf32>,
    %cst_47 = arith.constant 0.000000e+00 : f32
    %118 = vector.broadcast %cst_47 : f32 to vector<1x16xf32>
    %119 = arith.cmpf ogt, %116, %118 : vector<1x16xf32>
    %cst_48 = arith.constant 0xFF800000 : f32
    %120 = vector.broadcast %cst_48 : f32 to vector<1x16xf32>
    %121 = arith.select %119, %120, %104 : vector<1x16xi1>, vector<1x16xf32>
    %cst_49 = arith.constant dense<0xFF800000> : vector<1xf32>
    %122 = vector.multi_reduction <maximumf>, %121, %cst_49 [1] : vector<1x16xf32> to vector<1xf32>
    %123 = vector.shape_cast %122 : vector<1xf32> to vector<1x1xf32>
    %124 = vector.broadcast %123 : vector<1x1xf32> to vector<1x16xf32>
    %125 = arith.cmpf oeq, %121, %124 : vector<1x16xf32>
    %c16_i32_50 = arith.constant 16 : i32
    %126 = vector.broadcast %c16_i32_50 : i32 to vector<1x16xi32>
    %127 = arith.select %125, %36, %126 : vector<1x16xi1>, vector<1x16xi32>
    %cst_51 = arith.constant dense<2147483647> : vector<1xi32>
    %128 = vector.multi_reduction <minsi>, %127, %cst_51 [1] : vector<1x16xi32> to vector<1xi32>
    %129 = vector.shape_cast %128 : vector<1xi32> to vector<1x1xi32>
    %130 = vector.broadcast %129 : vector<1x1xi32> to vector<1x16xi32>
    %131 = arith.cmpi eq, %36, %130 : vector<1x16xi32>
    %132 = arith.extui %131 : vector<1x16xi1> to vector<1x16xi32>
    %133 = arith.sitofp %132 : vector<1x16xi32> to vector<1x16xf32>
    %c5 = arith.constant 5 : index
    %c0_52 = arith.constant 0 : index
    %134 = vector.load %arg19[%c5, %c0_52] : memref<8x16xf32, #tpu.memory_space<vmem>>, vector<1x16xf32>
    tpu.vector_store %arg19[%c5, %c0_52], %133 {strides = array<i32>} : memref<8x16xf32, #tpu.memory_space<vmem>>, vector<1x16xf32>,
    %cst_53 = arith.constant 0.000000e+00 : f32
    %135 = vector.broadcast %cst_53 : f32 to vector<1x16xf32>
    %136 = arith.cmpf ogt, %133, %135 : vector<1x16xf32>
    %cst_54 = arith.constant 0xFF800000 : f32
    %137 = vector.broadcast %cst_54 : f32 to vector<1x16xf32>
    %138 = arith.select %136, %137, %121 : vector<1x16xi1>, vector<1x16xf32>
    %cst_55 = arith.constant dense<0xFF800000> : vector<1xf32>
    %139 = vector.multi_reduction <maximumf>, %138, %cst_55 [1] : vector<1x16xf32> to vector<1xf32>
    %140 = vector.shape_cast %139 : vector<1xf32> to vector<1x1xf32>
    %141 = vector.broadcast %140 : vector<1x1xf32> to vector<1x16xf32>
    %142 = arith.cmpf oeq, %138, %141 : vector<1x16xf32>
    %c16_i32_56 = arith.constant 16 : i32
    %143 = vector.broadcast %c16_i32_56 : i32 to vector<1x16xi32>
    %144 = arith.select %142, %36, %143 : vector<1x16xi1>, vector<1x16xi32>
    %cst_57 = arith.constant dense<2147483647> : vector<1xi32>
    %145 = vector.multi_reduction <minsi>, %144, %cst_57 [1] : vector<1x16xi32> to vector<1xi32>
    %146 = vector.shape_cast %145 : vector<1xi32> to vector<1x1xi32>
    %147 = vector.broadcast %146 : vector<1x1xi32> to vector<1x16xi32>
    %148 = arith.cmpi eq, %36, %147 : vector<1x16xi32>
    %149 = arith.extui %148 : vector<1x16xi1> to vector<1x16xi32>
    %150 = arith.sitofp %149 : vector<1x16xi32> to vector<1x16xf32>
    %c6 = arith.constant 6 : index
    %c0_58 = arith.constant 0 : index
    %151 = vector.load %arg19[%c6, %c0_58] : memref<8x16xf32, #tpu.memory_space<vmem>>, vector<1x16xf32>
    tpu.vector_store %arg19[%c6, %c0_58], %150 {strides = array<i32>} : memref<8x16xf32, #tpu.memory_space<vmem>>, vector<1x16xf32>,
    %cst_59 = arith.constant 0.000000e+00 : f32
    %152 = vector.broadcast %cst_59 : f32 to vector<1x16xf32>
    %153 = arith.cmpf ogt, %150, %152 : vector<1x16xf32>
    %cst_60 = arith.constant 0xFF800000 : f32
    %154 = vector.broadcast %cst_60 : f32 to vector<1x16xf32>
    %155 = arith.select %153, %154, %138 : vector<1x16xi1>, vector<1x16xf32>
    %cst_61 = arith.constant dense<0xFF800000> : vector<1xf32>
    %156 = vector.multi_reduction <maximumf>, %155, %cst_61 [1] : vector<1x16xf32> to vector<1xf32>
    %157 = vector.shape_cast %156 : vector<1xf32> to vector<1x1xf32>
    %158 = vector.broadcast %157 : vector<1x1xf32> to vector<1x16xf32>
    %159 = arith.cmpf oeq, %155, %158 : vector<1x16xf32>
    %c16_i32_62 = arith.constant 16 : i32
    %160 = vector.broadcast %c16_i32_62 : i32 to vector<1x16xi32>
    %161 = arith.select %159, %36, %160 : vector<1x16xi1>, vector<1x16xi32>
    %cst_63 = arith.constant dense<2147483647> : vector<1xi32>
    %162 = vector.multi_reduction <minsi>, %161, %cst_63 [1] : vector<1x16xi32> to vector<1xi32>
    %163 = vector.shape_cast %162 : vector<1xi32> to vector<1x1xi32>
    %164 = vector.broadcast %163 : vector<1x1xi32> to vector<1x16xi32>
    %165 = arith.cmpi eq, %36, %164 : vector<1x16xi32>
    %166 = arith.extui %165 : vector<1x16xi1> to vector<1x16xi32>
    %167 = arith.sitofp %166 : vector<1x16xi32> to vector<1x16xf32>
    %c7 = arith.constant 7 : index
    %c0_64 = arith.constant 0 : index
    %168 = vector.load %arg19[%c7, %c0_64] : memref<8x16xf32, #tpu.memory_space<vmem>>, vector<1x16xf32>
    tpu.vector_store %arg19[%c7, %c0_64], %167 {strides = array<i32>} : memref<8x16xf32, #tpu.memory_space<vmem>>, vector<1x16xf32>,
    %c0_65 = arith.constant 0 : index
    %c0_66 = arith.constant 0 : index
    %169 = vector.load %arg19[%c0_65, %c0_66] : memref<8x16xf32, #tpu.memory_space<vmem>>, vector<8x16xf32>
    %cst_67 = arith.constant dense<0.000000e+00> : vector<8x32xf32>
    %170 = tpu.matmul %169, %28, %cst_67 {dimension_numbers = #tpu.dot_dimension_numbers<[1], [0], [0], [1], [0, 0, 1, 1], [], []>} : vector<8x16xf32>, vector<16x32xf32>, vector<8x32xf32> -> vector<8x32xf32>
    %cst_68 = arith.constant dense<0.000000e+00> : vector<8x16xf32>
    %171 = tpu.matmul %169, %0, %cst_68 {dimension_numbers = #tpu.dot_dimension_numbers<[1], [0], [0], [1], [0, 0, 1, 1], [], []>} : vector<8x16xf32>, vector<16x16xf32>, vector<8x16xf32> -> vector<8x16xf32>
    %cst_69 = arith.constant dense<0.000000e+00> : vector<8x8xf32>
    %172 = tpu.matmul %171, %169, %cst_69 {dimension_numbers = #tpu.dot_dimension_numbers<[1], [1], [0], [0], [0, 0, 1, 0], [], []>} : vector<8x16xf32>, vector<8x16xf32>, vector<8x8xf32> -> vector<8x8xf32>
    %c0_70 = arith.constant 0 : index
    %c0_71 = arith.constant 0 : index
    %173 = vector.load %arg8[%c0_70, %c0_71] : memref<1x32xf32, #tpu.memory_space<vmem>>, vector<1x32xf32>
    %c0_72 = arith.constant 0 : index
    %c0_73 = arith.constant 0 : index
    %174 = vector.load %arg9[%c0_72, %c0_73] : memref<1x32xf32, #tpu.memory_space<vmem>>, vector<1x32xf32>
    %175 = vector.broadcast %173 : vector<1x32xf32> to vector<8x32xf32>
    %176 = arith.mulf %170, %175 : vector<8x32xf32>
    %cst_74 = arith.constant dense<0.000000e+00> : vector<8xf32>
    %177 = vector.multi_reduction <add>, %176, %cst_74 [1] : vector<8x32xf32> to vector<8xf32>
    %178 = vector.shape_cast %177 : vector<8xf32> to vector<8x1xf32>
    %cst_75 = arith.constant dense<0.000000e+00> : vector<1x8xf32>
    %179 = tpu.matmul %174, %170, %cst_75 {dimension_numbers = #tpu.dot_dimension_numbers<[1], [1], [0], [0], [0, 0, 1, 0], [], []>} : vector<1x32xf32>, vector<8x32xf32>, vector<1x8xf32> -> vector<1x8xf32>
    %180 = vector.broadcast %178 : vector<8x1xf32> to vector<8x8xf32>
    %181 = vector.broadcast %179 : vector<1x8xf32> to vector<8x8xf32>
    %182 = arith.addf %180, %181 : vector<8x8xf32>
    %cst_76 = arith.constant 0.000000e+00 : f32
    %183 = vector.broadcast %cst_76 : f32 to vector<8x8xf32>
    %184 = arith.maximumf %182, %183 : vector<8x8xf32>
    %cst_77 = arith.constant 1.000000e+00 : f32
    %185 = vector.broadcast %cst_77 : f32 to vector<8x8xf32>
    %186 = arith.mulf %185, %172 : vector<8x8xf32>
    %187 = arith.addf %184, %186 : vector<8x8xf32>
    %cst_78 = arith.constant dense<0xFF800000> : vector<8xf32>
    %188 = vector.multi_reduction <maximumf>, %187, %cst_78 [1] : vector<8x8xf32> to vector<8xf32>
    %189 = vector.shape_cast %188 : vector<8xf32> to vector<8x1xf32>
    %190 = vector.broadcast %189 : vector<8x1xf32> to vector<8x8xf32>
    %191 = arith.subf %187, %190 : vector<8x8xf32>
    %192 = math.exp %191 : vector<8x8xf32>
    %cst_79 = arith.constant dense<0.000000e+00> : vector<8xf32>
    %193 = vector.multi_reduction <add>, %192, %cst_79 [1] : vector<8x8xf32> to vector<8xf32>
    %194 = vector.shape_cast %193 : vector<8xf32> to vector<8x1xf32>
    %195 = vector.broadcast %194 : vector<8x1xf32> to vector<8x8xf32>
    %196 = arith.divf %192, %195 : vector<8x8xf32>
    %cst_80 = arith.constant dense<0.000000e+00> : vector<32xf32>
    %197 = vector.multi_reduction <add>, %170, %cst_80 [0] : vector<8x32xf32> to vector<32xf32>
    %198 = vector.shape_cast %197 : vector<32xf32> to vector<1x32xf32>
    %cst_81 = arith.constant 8.000000e+00 : f32
    %199 = vector.broadcast %cst_81 : f32 to vector<1x32xf32>
    %200 = arith.divf %198, %199 : vector<1x32xf32>
    %cst_82 = arith.constant dense<0xFF800000> : vector<32xf32>
    %201 = vector.multi_reduction <maximumf>, %170, %cst_82 [0] : vector<8x32xf32> to vector<32xf32>
    %202 = vector.shape_cast %201 : vector<32xf32> to vector<1x32xf32>
    %c0_83 = arith.constant 0 : index
    %c0_84 = arith.constant 0 : index
    %203 = vector.load %arg4[%c0_83, %c0_84] : memref<32x32xf32, #tpu.memory_space<vmem>>, vector<32x32xf32>
    %c0_85 = arith.constant 0 : index
    %c0_86 = arith.constant 0 : index
    %204 = vector.load %arg5[%c0_85, %c0_86] : memref<1x32xf32, #tpu.memory_space<vmem>>, vector<1x32xf32>
    %cst_87 = arith.constant dense<0.000000e+00> : vector<8xf32>
    %205 = vector.multi_reduction <add>, %196, %cst_87 [1] : vector<8x8xf32> to vector<8xf32>
    %206 = vector.shape_cast %205 : vector<8xf32> to vector<8x1xf32>
    %cst_88 = arith.constant 0.000000e+00 : f32
    %207 = vector.broadcast %cst_88 : f32 to vector<8x1xf32>
    %208 = arith.cmpf ogt, %206, %207 : vector<8x1xf32>
    %cst_89 = arith.constant 9.99999996E-13 : f32
    %209 = vector.broadcast %cst_89 : f32 to vector<8x1xf32>
    %210 = arith.maximumf %206, %209 : vector<8x1xf32>
    %211 = math.rsqrt %210 : vector<8x1xf32>
    %cst_90 = arith.constant 0.000000e+00 : f32
    %212 = vector.broadcast %cst_90 : f32 to vector<8x1xf32>
    %213 = arith.select %208, %211, %212 : vector<8x1xi1>, vector<8x1xf32>
    %214 = vector.broadcast %213 : vector<8x1xf32> to vector<8x32xf32>
    %215 = arith.mulf %170, %214 : vector<8x32xf32>
    %cst_91 = arith.constant dense<0.000000e+00> : vector<8x32xf32>
    %216 = tpu.matmul %196, %215, %cst_91 {dimension_numbers = #tpu.dot_dimension_numbers<[1], [0], [0], [1], [0, 0, 1, 1], [], []>} : vector<8x8xf32>, vector<8x32xf32>, vector<8x32xf32> -> vector<8x32xf32>
    %217 = vector.broadcast %213 : vector<8x1xf32> to vector<8x32xf32>
    %218 = arith.mulf %216, %217 : vector<8x32xf32>
    %cst_92 = arith.constant dense<0.000000e+00> : vector<8x32xf32>
    %219 = tpu.matmul %218, %203, %cst_92 {dimension_numbers = #tpu.dot_dimension_numbers<[1], [0], [0], [1], [0, 0, 1, 1], [], []>} : vector<8x32xf32>, vector<32x32xf32>, vector<8x32xf32> -> vector<8x32xf32>
    %220 = vector.broadcast %204 : vector<1x32xf32> to vector<8x32xf32>
    %221 = arith.addf %219, %220 : vector<8x32xf32>
    %cst_93 = arith.constant 0.000000e+00 : f32
    %222 = vector.broadcast %cst_93 : f32 to vector<8x32xf32>
    %223 = arith.maximumf %221, %222 : vector<8x32xf32>
    %cst_94 = arith.constant 0.000000e+00 : f32
    %224 = vector.broadcast %cst_94 : f32 to vector<8x1xf32>
    %225 = arith.cmpf ogt, %206, %224 : vector<8x1xf32>
    %cst_95 = arith.constant 1.000000e+00 : f32
    %226 = vector.broadcast %cst_95 : f32 to vector<8x1xf32>
    %227 = arith.divf %226, %206 : vector<8x1xf32>
    %cst_96 = arith.constant 0.000000e+00 : f32
    %228 = vector.broadcast %cst_96 : f32 to vector<8x1xf32>
    %229 = arith.select %225, %227, %228 : vector<8x1xi1>, vector<8x1xf32>
    %cst_97 = arith.constant dense<0.000000e+00> : vector<8x32xf32>
    %230 = tpu.matmul %196, %223, %cst_97 {dimension_numbers = #tpu.dot_dimension_numbers<[1], [0], [0], [1], [0, 0, 1, 1], [], []>} : vector<8x8xf32>, vector<8x32xf32>, vector<8x32xf32> -> vector<8x32xf32>
    %231 = vector.broadcast %229 : vector<8x1xf32> to vector<8x32xf32>
    %232 = arith.mulf %230, %231 : vector<8x32xf32>
    %233 = arith.subf %223, %232 : vector<8x32xf32>
    %234 = math.absf %233 : vector<8x32xf32>
    %cst_98 = arith.constant 1.000000e+00 : f32
    %235 = vector.broadcast %cst_98 : f32 to vector<1x32xf32>
    %cst_99 = arith.constant dense<0.000000e+00> : vector<1x8xf32>
    %236 = tpu.matmul %235, %234, %cst_99 {dimension_numbers = #tpu.dot_dimension_numbers<[1], [1], [0], [0], [0, 0, 1, 0], [], []>} : vector<1x32xf32>, vector<8x32xf32>, vector<1x8xf32> -> vector<1x8xf32>
    %237 = tpu.iota {dimensions = array<i32: 1>} : vector<1x8xi32>
    %cst_100 = arith.constant dense<0xFF800000> : vector<1xf32>
    %238 = vector.multi_reduction <maximumf>, %236, %cst_100 [1] : vector<1x8xf32> to vector<1xf32>
    %239 = vector.shape_cast %238 : vector<1xf32> to vector<1x1xf32>
    %240 = vector.broadcast %239 : vector<1x1xf32> to vector<1x8xf32>
    %241 = arith.cmpf oeq, %236, %240 : vector<1x8xf32>
    %c8_i32 = arith.constant 8 : i32
    %242 = vector.broadcast %c8_i32 : i32 to vector<1x8xi32>
    %243 = arith.select %241, %237, %242 : vector<1x8xi1>, vector<1x8xi32>
    %cst_101 = arith.constant dense<2147483647> : vector<1xi32>
    %244 = vector.multi_reduction <minsi>, %243, %cst_101 [1] : vector<1x8xi32> to vector<1xi32>
    %245 = vector.shape_cast %244 : vector<1xi32> to vector<1x1xi32>
    %246 = vector.broadcast %245 : vector<1x1xi32> to vector<1x8xi32>
    %247 = arith.cmpi eq, %237, %246 : vector<1x8xi32>
    %248 = arith.extui %247 : vector<1x8xi1> to vector<1x8xi32>
    %249 = arith.sitofp %248 : vector<1x8xi32> to vector<1x8xf32>
    %c0_102 = arith.constant 0 : index
    %c0_103 = arith.constant 0 : index
    %250 = vector.load %arg20[%c0_102, %c0_103] : memref<4x8xf32, #tpu.memory_space<vmem>>, vector<1x8xf32>
    tpu.vector_store %arg20[%c0_102, %c0_103], %249 {strides = array<i32>} : memref<4x8xf32, #tpu.memory_space<vmem>>, vector<1x8xf32>,
    %cst_104 = arith.constant 0.000000e+00 : f32
    %251 = vector.broadcast %cst_104 : f32 to vector<1x8xf32>
    %252 = arith.cmpf ogt, %249, %251 : vector<1x8xf32>
    %cst_105 = arith.constant 0xFF800000 : f32
    %253 = vector.broadcast %cst_105 : f32 to vector<1x8xf32>
    %254 = arith.select %252, %253, %236 : vector<1x8xi1>, vector<1x8xf32>
    %cst_106 = arith.constant dense<0xFF800000> : vector<1xf32>
    %255 = vector.multi_reduction <maximumf>, %254, %cst_106 [1] : vector<1x8xf32> to vector<1xf32>
    %256 = vector.shape_cast %255 : vector<1xf32> to vector<1x1xf32>
    %257 = vector.broadcast %256 : vector<1x1xf32> to vector<1x8xf32>
    %258 = arith.cmpf oeq, %254, %257 : vector<1x8xf32>
    %c8_i32_107 = arith.constant 8 : i32
    %259 = vector.broadcast %c8_i32_107 : i32 to vector<1x8xi32>
    %260 = arith.select %258, %237, %259 : vector<1x8xi1>, vector<1x8xi32>
    %cst_108 = arith.constant dense<2147483647> : vector<1xi32>
    %261 = vector.multi_reduction <minsi>, %260, %cst_108 [1] : vector<1x8xi32> to vector<1xi32>
    %262 = vector.shape_cast %261 : vector<1xi32> to vector<1x1xi32>
    %263 = vector.broadcast %262 : vector<1x1xi32> to vector<1x8xi32>
    %264 = arith.cmpi eq, %237, %263 : vector<1x8xi32>
    %265 = arith.extui %264 : vector<1x8xi1> to vector<1x8xi32>
    %266 = arith.sitofp %265 : vector<1x8xi32> to vector<1x8xf32>
    %c1_109 = arith.constant 1 : index
    %c0_110 = arith.constant 0 : index
    %267 = vector.load %arg20[%c1_109, %c0_110] : memref<4x8xf32, #tpu.memory_space<vmem>>, vector<1x8xf32>
    tpu.vector_store %arg20[%c1_109, %c0_110], %266 {strides = array<i32>} : memref<4x8xf32, #tpu.memory_space<vmem>>, vector<1x8xf32>,
    %cst_111 = arith.constant 0.000000e+00 : f32
    %268 = vector.broadcast %cst_111 : f32 to vector<1x8xf32>
    %269 = arith.cmpf ogt, %266, %268 : vector<1x8xf32>
    %cst_112 = arith.constant 0xFF800000 : f32
    %270 = vector.broadcast %cst_112 : f32 to vector<1x8xf32>
    %271 = arith.select %269, %270, %254 : vector<1x8xi1>, vector<1x8xf32>
    %cst_113 = arith.constant dense<0xFF800000> : vector<1xf32>
    %272 = vector.multi_reduction <maximumf>, %271, %cst_113 [1] : vector<1x8xf32> to vector<1xf32>
    %273 = vector.shape_cast %272 : vector<1xf32> to vector<1x1xf32>
    %274 = vector.broadcast %273 : vector<1x1xf32> to vector<1x8xf32>
    %275 = arith.cmpf oeq, %271, %274 : vector<1x8xf32>
    %c8_i32_114 = arith.constant 8 : i32
    %276 = vector.broadcast %c8_i32_114 : i32 to vector<1x8xi32>
    %277 = arith.select %275, %237, %276 : vector<1x8xi1>, vector<1x8xi32>
    %cst_115 = arith.constant dense<2147483647> : vector<1xi32>
    %278 = vector.multi_reduction <minsi>, %277, %cst_115 [1] : vector<1x8xi32> to vector<1xi32>
    %279 = vector.shape_cast %278 : vector<1xi32> to vector<1x1xi32>
    %280 = vector.broadcast %279 : vector<1x1xi32> to vector<1x8xi32>
    %281 = arith.cmpi eq, %237, %280 : vector<1x8xi32>
    %282 = arith.extui %281 : vector<1x8xi1> to vector<1x8xi32>
    %283 = arith.sitofp %282 : vector<1x8xi32> to vector<1x8xf32>
    %c2_116 = arith.constant 2 : index
    %c0_117 = arith.constant 0 : index
    %284 = vector.load %arg20[%c2_116, %c0_117] : memref<4x8xf32, #tpu.memory_space<vmem>>, vector<1x8xf32>
    tpu.vector_store %arg20[%c2_116, %c0_117], %283 {strides = array<i32>} : memref<4x8xf32, #tpu.memory_space<vmem>>, vector<1x8xf32>,
    %cst_118 = arith.constant 0.000000e+00 : f32
    %285 = vector.broadcast %cst_118 : f32 to vector<1x8xf32>
    %286 = arith.cmpf ogt, %283, %285 : vector<1x8xf32>
    %cst_119 = arith.constant 0xFF800000 : f32
    %287 = vector.broadcast %cst_119 : f32 to vector<1x8xf32>
    %288 = arith.select %286, %287, %271 : vector<1x8xi1>, vector<1x8xf32>
    %cst_120 = arith.constant dense<0xFF800000> : vector<1xf32>
    %289 = vector.multi_reduction <maximumf>, %288, %cst_120 [1] : vector<1x8xf32> to vector<1xf32>
    %290 = vector.shape_cast %289 : vector<1xf32> to vector<1x1xf32>
    %291 = vector.broadcast %290 : vector<1x1xf32> to vector<1x8xf32>
    %292 = arith.cmpf oeq, %288, %291 : vector<1x8xf32>
    %c8_i32_121 = arith.constant 8 : i32
    %293 = vector.broadcast %c8_i32_121 : i32 to vector<1x8xi32>
    %294 = arith.select %292, %237, %293 : vector<1x8xi1>, vector<1x8xi32>
    %cst_122 = arith.constant dense<2147483647> : vector<1xi32>
    %295 = vector.multi_reduction <minsi>, %294, %cst_122 [1] : vector<1x8xi32> to vector<1xi32>
    %296 = vector.shape_cast %295 : vector<1xi32> to vector<1x1xi32>
    %297 = vector.broadcast %296 : vector<1x1xi32> to vector<1x8xi32>
    %298 = arith.cmpi eq, %237, %297 : vector<1x8xi32>
    %299 = arith.extui %298 : vector<1x8xi1> to vector<1x8xi32>
    %300 = arith.sitofp %299 : vector<1x8xi32> to vector<1x8xf32>
    %c3_123 = arith.constant 3 : index
    %c0_124 = arith.constant 0 : index
    %301 = vector.load %arg20[%c3_123, %c0_124] : memref<4x8xf32, #tpu.memory_space<vmem>>, vector<1x8xf32>
    tpu.vector_store %arg20[%c3_123, %c0_124], %300 {strides = array<i32>} : memref<4x8xf32, #tpu.memory_space<vmem>>, vector<1x8xf32>,
    %c0_125 = arith.constant 0 : index
    %c0_126 = arith.constant 0 : index
    %302 = vector.load %arg20[%c0_125, %c0_126] : memref<4x8xf32, #tpu.memory_space<vmem>>, vector<4x8xf32>
    %cst_127 = arith.constant dense<0.000000e+00> : vector<4x32xf32>
    %303 = tpu.matmul %302, %223, %cst_127 {dimension_numbers = #tpu.dot_dimension_numbers<[1], [0], [0], [1], [0, 0, 1, 1], [], []>} : vector<4x8xf32>, vector<8x32xf32>, vector<4x32xf32> -> vector<4x32xf32>
    %cst_128 = arith.constant dense<0.000000e+00> : vector<4x8xf32>
    %304 = tpu.matmul %302, %196, %cst_128 {dimension_numbers = #tpu.dot_dimension_numbers<[1], [0], [0], [1], [0, 0, 1, 1], [], []>} : vector<4x8xf32>, vector<8x8xf32>, vector<4x8xf32> -> vector<4x8xf32>
    %cst_129 = arith.constant dense<0.000000e+00> : vector<4x4xf32>
    %305 = tpu.matmul %304, %302, %cst_129 {dimension_numbers = #tpu.dot_dimension_numbers<[1], [1], [0], [0], [0, 0, 1, 0], [], []>} : vector<4x8xf32>, vector<4x8xf32>, vector<4x4xf32> -> vector<4x4xf32>
    %c0_130 = arith.constant 0 : index
    %c0_131 = arith.constant 0 : index
    %306 = vector.load %arg10[%c0_130, %c0_131] : memref<1x32xf32, #tpu.memory_space<vmem>>, vector<1x32xf32>
    %c0_132 = arith.constant 0 : index
    %c0_133 = arith.constant 0 : index
    %307 = vector.load %arg11[%c0_132, %c0_133] : memref<1x32xf32, #tpu.memory_space<vmem>>, vector<1x32xf32>
    %308 = vector.broadcast %306 : vector<1x32xf32> to vector<4x32xf32>
    %309 = arith.mulf %303, %308 : vector<4x32xf32>
    %cst_134 = arith.constant dense<0.000000e+00> : vector<4xf32>
    %310 = vector.multi_reduction <add>, %309, %cst_134 [1] : vector<4x32xf32> to vector<4xf32>
    %311 = vector.shape_cast %310 : vector<4xf32> to vector<4x1xf32>
    %cst_135 = arith.constant dense<0.000000e+00> : vector<1x4xf32>
    %312 = tpu.matmul %307, %303, %cst_135 {dimension_numbers = #tpu.dot_dimension_numbers<[1], [1], [0], [0], [0, 0, 1, 0], [], []>} : vector<1x32xf32>, vector<4x32xf32>, vector<1x4xf32> -> vector<1x4xf32>
    %313 = vector.broadcast %311 : vector<4x1xf32> to vector<4x4xf32>
    %314 = vector.broadcast %312 : vector<1x4xf32> to vector<4x4xf32>
    %315 = arith.addf %313, %314 : vector<4x4xf32>
    %cst_136 = arith.constant 0.000000e+00 : f32
    %316 = vector.broadcast %cst_136 : f32 to vector<4x4xf32>
    %317 = arith.maximumf %315, %316 : vector<4x4xf32>
    %cst_137 = arith.constant 1.000000e+00 : f32
    %318 = vector.broadcast %cst_137 : f32 to vector<4x4xf32>
    %319 = arith.mulf %318, %305 : vector<4x4xf32>
    %320 = arith.addf %317, %319 : vector<4x4xf32>
    %cst_138 = arith.constant dense<0xFF800000> : vector<4xf32>
    %321 = vector.multi_reduction <maximumf>, %320, %cst_138 [1] : vector<4x4xf32> to vector<4xf32>
    %322 = vector.shape_cast %321 : vector<4xf32> to vector<4x1xf32>
    %323 = vector.broadcast %322 : vector<4x1xf32> to vector<4x4xf32>
    %324 = arith.subf %320, %323 : vector<4x4xf32>
    %325 = math.exp %324 : vector<4x4xf32>
    %cst_139 = arith.constant dense<0.000000e+00> : vector<4xf32>
    %326 = vector.multi_reduction <add>, %325, %cst_139 [1] : vector<4x4xf32> to vector<4xf32>
    %327 = vector.shape_cast %326 : vector<4xf32> to vector<4x1xf32>
    %328 = vector.broadcast %327 : vector<4x1xf32> to vector<4x4xf32>
    %329 = arith.divf %325, %328 : vector<4x4xf32>
    %cst_140 = arith.constant dense<0.000000e+00> : vector<32xf32>
    %330 = vector.multi_reduction <add>, %303, %cst_140 [0] : vector<4x32xf32> to vector<32xf32>
    %331 = vector.shape_cast %330 : vector<32xf32> to vector<1x32xf32>
    %cst_141 = arith.constant 4.000000e+00 : f32
    %332 = vector.broadcast %cst_141 : f32 to vector<1x32xf32>
    %333 = arith.divf %331, %332 : vector<1x32xf32>
    %334 = arith.addf %200, %333 : vector<1x32xf32>
    %cst_142 = arith.constant dense<0xFF800000> : vector<32xf32>
    %335 = vector.multi_reduction <maximumf>, %303, %cst_142 [0] : vector<4x32xf32> to vector<32xf32>
    %336 = vector.shape_cast %335 : vector<32xf32> to vector<1x32xf32>
    %337 = arith.addf %202, %336 : vector<1x32xf32>
    %c0_143 = arith.constant 0 : index
    %c0_144 = arith.constant 0 : index
    %338 = vector.load %arg6[%c0_143, %c0_144] : memref<32x32xf32, #tpu.memory_space<vmem>>, vector<32x32xf32>
    %c0_145 = arith.constant 0 : index
    %c0_146 = arith.constant 0 : index
    %339 = vector.load %arg7[%c0_145, %c0_146] : memref<1x32xf32, #tpu.memory_space<vmem>>, vector<1x32xf32>
    %cst_147 = arith.constant dense<0.000000e+00> : vector<4xf32>
    %340 = vector.multi_reduction <add>, %329, %cst_147 [1] : vector<4x4xf32> to vector<4xf32>
    %341 = vector.shape_cast %340 : vector<4xf32> to vector<4x1xf32>
    %cst_148 = arith.constant 0.000000e+00 : f32
    %342 = vector.broadcast %cst_148 : f32 to vector<4x1xf32>
    %343 = arith.cmpf ogt, %341, %342 : vector<4x1xf32>
    %cst_149 = arith.constant 9.99999996E-13 : f32
    %344 = vector.broadcast %cst_149 : f32 to vector<4x1xf32>
    %345 = arith.maximumf %341, %344 : vector<4x1xf32>
    %346 = math.rsqrt %345 : vector<4x1xf32>
    %cst_150 = arith.constant 0.000000e+00 : f32
    %347 = vector.broadcast %cst_150 : f32 to vector<4x1xf32>
    %348 = arith.select %343, %346, %347 : vector<4x1xi1>, vector<4x1xf32>
    %349 = vector.broadcast %348 : vector<4x1xf32> to vector<4x32xf32>
    %350 = arith.mulf %303, %349 : vector<4x32xf32>
    %cst_151 = arith.constant dense<0.000000e+00> : vector<4x32xf32>
    %351 = tpu.matmul %329, %350, %cst_151 {dimension_numbers = #tpu.dot_dimension_numbers<[1], [0], [0], [1], [0, 0, 1, 1], [], []>} : vector<4x4xf32>, vector<4x32xf32>, vector<4x32xf32> -> vector<4x32xf32>
    %352 = vector.broadcast %348 : vector<4x1xf32> to vector<4x32xf32>
    %353 = arith.mulf %351, %352 : vector<4x32xf32>
    %cst_152 = arith.constant dense<0.000000e+00> : vector<4x32xf32>
    %354 = tpu.matmul %353, %338, %cst_152 {dimension_numbers = #tpu.dot_dimension_numbers<[1], [0], [0], [1], [0, 0, 1, 1], [], []>} : vector<4x32xf32>, vector<32x32xf32>, vector<4x32xf32> -> vector<4x32xf32>
    %355 = vector.broadcast %339 : vector<1x32xf32> to vector<4x32xf32>
    %356 = arith.addf %354, %355 : vector<4x32xf32>
    %cst_153 = arith.constant 0.000000e+00 : f32
    %357 = vector.broadcast %cst_153 : f32 to vector<4x32xf32>
    %358 = arith.maximumf %356, %357 : vector<4x32xf32>
    %cst_154 = arith.constant dense<0.000000e+00> : vector<32xf32>
    %359 = vector.multi_reduction <add>, %358, %cst_154 [0] : vector<4x32xf32> to vector<32xf32>
    %360 = vector.shape_cast %359 : vector<32xf32> to vector<1x32xf32>
    %cst_155 = arith.constant 4.000000e+00 : f32
    %361 = vector.broadcast %cst_155 : f32 to vector<1x32xf32>
    %362 = arith.divf %360, %361 : vector<1x32xf32>
    %363 = arith.addf %334, %362 : vector<1x32xf32>
    %cst_156 = arith.constant dense<0xFF800000> : vector<32xf32>
    %364 = vector.multi_reduction <maximumf>, %358, %cst_156 [0] : vector<4x32xf32> to vector<32xf32>
    %365 = vector.shape_cast %364 : vector<32xf32> to vector<1x32xf32>
    %366 = arith.addf %337, %365 : vector<1x32xf32>
    %c0_157 = arith.constant 0 : index
    %c0_158 = arith.constant 0 : index
    %367 = vector.load %arg12[%c0_157, %c0_158] : memref<64x32xf32, #tpu.memory_space<vmem>>, vector<32x32xf32>
    %cst_159 = arith.constant dense<0.000000e+00> : vector<1x32xf32>
    %368 = tpu.matmul %363, %367, %cst_159 {dimension_numbers = #tpu.dot_dimension_numbers<[1], [0], [0], [1], [0, 0, 1, 1], [], []>} : vector<1x32xf32>, vector<32x32xf32>, vector<1x32xf32> -> vector<1x32xf32>
    %c32 = arith.constant 32 : index
    %c0_160 = arith.constant 0 : index
    %369 = vector.load %arg12[%c32, %c0_160] : memref<64x32xf32, #tpu.memory_space<vmem>>, vector<32x32xf32>
    %cst_161 = arith.constant dense<0.000000e+00> : vector<1x32xf32>
    %370 = tpu.matmul %366, %369, %cst_161 {dimension_numbers = #tpu.dot_dimension_numbers<[1], [0], [0], [1], [0, 0, 1, 1], [], []>} : vector<1x32xf32>, vector<32x32xf32>, vector<1x32xf32> -> vector<1x32xf32>
    %371 = arith.addf %368, %370 : vector<1x32xf32>
    %c0_162 = arith.constant 0 : index
    %c0_163 = arith.constant 0 : index
    %372 = vector.load %arg13[%c0_162, %c0_163] : memref<1x32xf32, #tpu.memory_space<vmem>>, vector<1x32xf32>
    %373 = arith.addf %371, %372 : vector<1x32xf32>
    %cst_164 = arith.constant 0.000000e+00 : f32
    %374 = vector.broadcast %cst_164 : f32 to vector<1x32xf32>
    %375 = arith.maximumf %373, %374 : vector<1x32xf32>
    %c0_165 = arith.constant 0 : index
    %c0_166 = arith.constant 0 : index
    %376 = vector.load %arg14[%c0_165, %c0_166] : memref<32x16xf32, #tpu.memory_space<vmem>>, vector<32x16xf32>
    %cst_167 = arith.constant dense<0.000000e+00> : vector<1x16xf32>
    %377 = tpu.matmul %375, %376, %cst_167 {dimension_numbers = #tpu.dot_dimension_numbers<[1], [0], [0], [1], [0, 0, 1, 1], [], []>} : vector<1x32xf32>, vector<32x16xf32>, vector<1x16xf32> -> vector<1x16xf32>
    %c0_168 = arith.constant 0 : index
    %c0_169 = arith.constant 0 : index
    %378 = vector.load %arg15[%c0_168, %c0_169] : memref<1x16xf32, #tpu.memory_space<vmem>>, vector<1x16xf32>
    %379 = arith.addf %377, %378 : vector<1x16xf32>
    %cst_170 = arith.constant 0.000000e+00 : f32
    %380 = vector.broadcast %cst_170 : f32 to vector<1x16xf32>
    %381 = arith.maximumf %379, %380 : vector<1x16xf32>
    %c0_171 = arith.constant 0 : index
    %c0_172 = arith.constant 0 : index
    %382 = vector.load %arg16[%c0_171, %c0_172] : memref<16x4xf32, #tpu.memory_space<vmem>>, vector<16x4xf32>
    %cst_173 = arith.constant dense<0.000000e+00> : vector<1x4xf32>
    %383 = tpu.matmul %381, %382, %cst_173 {dimension_numbers = #tpu.dot_dimension_numbers<[1], [0], [0], [1], [0, 0, 1, 1], [], []>} : vector<1x16xf32>, vector<16x4xf32>, vector<1x4xf32> -> vector<1x4xf32>
    %c0_174 = arith.constant 0 : index
    %c0_175 = arith.constant 0 : index
    %384 = vector.load %arg17[%c0_174, %c0_175] : memref<1x4xf32, #tpu.memory_space<vmem>>, vector<1x4xf32>
    %385 = arith.addf %383, %384 : vector<1x4xf32>
    %cst_176 = arith.constant dense<0xFF800000> : vector<1xf32>
    %386 = vector.multi_reduction <maximumf>, %385, %cst_176 [1] : vector<1x4xf32> to vector<1xf32>
    %387 = vector.shape_cast %386 : vector<1xf32> to vector<1x1xf32>
    %388 = vector.broadcast %387 : vector<1x1xf32> to vector<1x4xf32>
    %389 = arith.subf %385, %388 : vector<1x4xf32>
    %390 = math.exp %389 : vector<1x4xf32>
    %cst_177 = arith.constant dense<0.000000e+00> : vector<1xf32>
    %391 = vector.multi_reduction <add>, %390, %cst_177 [1] : vector<1x4xf32> to vector<1xf32>
    %392 = vector.shape_cast %391 : vector<1xf32> to vector<1x1xf32>
    %393 = math.log %392 : vector<1x1xf32>
    %394 = vector.broadcast %393 : vector<1x1xf32> to vector<1x4xf32>
    %395 = arith.subf %389, %394 : vector<1x4xf32>
    %c0_178 = arith.constant 0 : index
    %c0_179 = arith.constant 0 : index
    %396 = vector.load %arg18[%c0_178, %c0_179] : memref<1x4xf32, #tpu.memory_space<vmem>>, vector<1x4xf32>
    tpu.vector_store %arg18[%c0_178, %c0_179], %395 {strides = array<i32>} : memref<1x4xf32, #tpu.memory_space<vmem>>, vector<1x4xf32>,
    return
  }
}

</mosaic_0001>

<llo_original>
// kernel: simple_model_forward.1
$region0: #{simple_model_forward.1}
  #allocation0 [shape = 'u32[]', space=smem, size = 0x4, offset = 0x4, fixed_abs, tag = 'smem constant byte address 0x4 - core index']
  #allocation1 [shape = 'u32[72,128]{1,0:T(1,128)}', space=vmem, size = 0x9000, scoped, tag = 'internal scratch']
  #allocation2 [shape = 'f32[8,16]{1,0:T(8,128)}', space=vmem, size = 0x1000, scoped, tag = 'scratch operand']
  #allocation3 [shape = 'f32[4,8]{1,0:T(4,128)}', space=vmem, size = 0x800, scoped, tag = 'scratch operand']
  %s0 = inlined_call_operand.vmem [shape: f32[16,16], index: 0, kind: input, shape index: {}]
  %s1 = inlined_call_operand.vmem [shape: f32[16,8], index: 1, kind: input, shape index: {}]
  %s2 = inlined_call_operand.vmem [shape: f32[8,32], index: 2, kind: input, shape index: {}]
  %s3 = inlined_call_operand.vmem [shape: f32[1,32], index: 3, kind: input, shape index: {}]
  %s4 = inlined_call_operand.vmem [shape: f32[32,32], index: 4, kind: input, shape index: {}]
  %s5 = inlined_call_operand.vmem [shape: f32[1,32], index: 5, kind: input, shape index: {}]
  %s6 = inlined_call_operand.vmem [shape: f32[32,32], index: 6, kind: input, shape index: {}]
  %s7 = inlined_call_operand.vmem [shape: f32[1,32], index: 7, kind: input, shape index: {}]
  %s8 = inlined_call_operand.vmem [shape: f32[1,32], index: 8, kind: input, shape index: {}]
  %s9 = inlined_call_operand.vmem [shape: f32[1,32], index: 9, kind: input, shape index: {}]
  %s10 = inlined_call_operand.vmem [shape: f32[1,32], index: 10, kind: input, shape index: {}]
  %s11 = inlined_call_operand.vmem [shape: f32[1,32], index: 11, kind: input, shape index: {}]
  %s12 = inlined_call_operand.vmem [shape: f32[64,32], index: 12, kind: input, shape index: {}]
  %s13 = inlined_call_operand.vmem [shape: f32[1,32], index: 13, kind: input, shape index: {}]
  %s14 = inlined_call_operand.vmem [shape: f32[32,16], index: 14, kind: input, shape index: {}]
  %s15 = inlined_call_operand.vmem [shape: f32[1,16], index: 15, kind: input, shape index: {}]
  %s16 = inlined_call_operand.vmem [shape: f32[16,4], index: 16, kind: input, shape index: {}]
  %s17 = inlined_call_operand.vmem [shape: f32[1,4], index: 17, kind: input, shape index: {}]
  %s18 = inlined_call_operand.hbm [shape: f32[1,4], index: 18, kind: output, shape index: {}]
  %s19 = sld [smem:[#allocation0]]
  $region82: #{simple_model_forward.1} parent=0
    _
  %s21 = ssub.s32 1, %s19
  %s22 = scalar_select 0, %s21, %s19
  $region1: #{simple_model_forward.1} parent=0
    #allocation4 [shape = 'u8[512]{0}', space=vmem, size = 0x400, scoped, tag = 'output window, operand 0, single buffered']
    #allocation5 [shape = 's32[1]{0}', space=sflag, size = 0x4, scoped, tag = 'scoped memory for simple_model_forward.1']
    %23 = vsyncpa [#allocation5], 0
    // Predicated region
    $region2: #{simple_model_forward.1} parent=1 // pred_check
      _
    $region3: #{simple_model_forward.1} parent=1 // pred_check_branch
      %25 = sbr.rel (0) target = $region5
    $region4: #{simple_model_forward.1} parent=1 // pred_region
      _
    $region5: #{simple_model_forward.1} parent=1 // pred_fallthru
      _
    // Predicated region
    $region6: #{simple_model_forward.1} parent=1 // pred_check
      _
    $region7: #{simple_model_forward.1} parent=1 // pred_check_branch
      %27 = sbr.rel (0) target = $region9
    $region8: #{simple_model_forward.1} parent=1 // pred_region
      _
    $region9: #{simple_model_forward.1} parent=1 // pred_fallthru
      _
    // Predicated region
    $region10: #{simple_model_forward.1} parent=1 // pred_check
      _
    $region11: #{simple_model_forward.1} parent=1 // pred_check_branch
      %29 = sbr.rel (0) target = $region13
    $region12: #{simple_model_forward.1} parent=1 // pred_region
      _
    $region13: #{simple_model_forward.1} parent=1 // pred_fallthru
      _
    // Predicated region
    $region14: #{simple_model_forward.1} parent=1 // pred_check
      _
    $region15: #{simple_model_forward.1} parent=1 // pred_check_branch
      %31 = sbr.rel (0) target = $region17
    $region16: #{simple_model_forward.1} parent=1 // pred_region
      _
    $region17: #{simple_model_forward.1} parent=1 // pred_fallthru
      _
    // Predicated region
    $region18: #{simple_model_forward.1} parent=1 // pred_check
      _
    $region19: #{simple_model_forward.1} parent=1 // pred_check_branch
      %33 = sbr.rel (0) target = $region21
    $region20: #{simple_model_forward.1} parent=1 // pred_region
      _
    $region21: #{simple_model_forward.1} parent=1 // pred_fallthru
      _
    // Predicated region
    $region22: #{simple_model_forward.1} parent=1 // pred_check
      _
    $region23: #{simple_model_forward.1} parent=1 // pred_check_branch
      %35 = sbr.rel (0) target = $region25
    $region24: #{simple_model_forward.1} parent=1 // pred_region
      _
    $region25: #{simple_model_forward.1} parent=1 // pred_fallthru
      _
    // Predicated region
    $region26: #{simple_model_forward.1} parent=1 // pred_check
      _
    $region27: #{simple_model_forward.1} parent=1 // pred_check_branch
      %37 = sbr.rel (0) target = $region29
    $region28: #{simple_model_forward.1} parent=1 // pred_region
      _
    $region29: #{simple_model_forward.1} parent=1 // pred_fallthru
      _
    // Predicated region
    $region30: #{simple_model_forward.1} parent=1 // pred_check
      _
    $region31: #{simple_model_forward.1} parent=1 // pred_check_branch
      %39 = sbr.rel (0) target = $region33
    $region32: #{simple_model_forward.1} parent=1 // pred_region
      _
    $region33: #{simple_model_forward.1} parent=1 // pred_fallthru
      _
    // Predicated region
    $region34: #{simple_model_forward.1} parent=1 // pred_check
      _
    $region35: #{simple_model_forward.1} parent=1 // pred_check_branch
      %41 = sbr.rel (0) target = $region37
    $region36: #{simple_model_forward.1} parent=1 // pred_region
      _
    $region37: #{simple_model_forward.1} parent=1 // pred_fallthru
      _
    // Predicated region
    $region38: #{simple_model_forward.1} parent=1 // pred_check
      _
    $region39: #{simple_model_forward.1} parent=1 // pred_check_branch
      %43 = sbr.rel (0) target = $region41
    $region40: #{simple_model_forward.1} parent=1 // pred_region
      _
    $region41: #{simple_model_forward.1} parent=1 // pred_fallthru
      _
    // Predicated region
    $region42: #{simple_model_forward.1} parent=1 // pred_check
      _
    $region43: #{simple_model_forward.1} parent=1 // pred_check_branch
      %45 = sbr.rel (0) target = $region45
    $region44: #{simple_model_forward.1} parent=1 // pred_region
      _
    $region45: #{simple_model_forward.1} parent=1 // pred_fallthru
      _
    // Predicated region
    $region46: #{simple_model_forward.1} parent=1 // pred_check
      _
    $region47: #{simple_model_forward.1} parent=1 // pred_check_branch
      %47 = sbr.rel (0) target = $region49
    $region48: #{simple_model_forward.1} parent=1 // pred_region
      _
    $region49: #{simple_model_forward.1} parent=1 // pred_fallthru
      _
    // Predicated region
    $region50: #{simple_model_forward.1} parent=1 // pred_check
      _
    $region51: #{simple_model_forward.1} parent=1 // pred_check_branch
      %49 = sbr.rel (0) target = $region53
    $region52: #{simple_model_forward.1} parent=1 // pred_region
      _
    $region53: #{simple_model_forward.1} parent=1 // pred_fallthru
      _
    // Predicated region
    $region54: #{simple_model_forward.1} parent=1 // pred_check
      _
    $region55: #{simple_model_forward.1} parent=1 // pred_check_branch
      %51 = sbr.rel (0) target = $region57
    $region56: #{simple_model_forward.1} parent=1 // pred_region
      _
    $region57: #{simple_model_forward.1} parent=1 // pred_fallthru
      _
    // Predicated region
    $region58: #{simple_model_forward.1} parent=1 // pred_check
      _
    $region59: #{simple_model_forward.1} parent=1 // pred_check_branch
      %53 = sbr.rel (0) target = $region61
    $region60: #{simple_model_forward.1} parent=1 // pred_region
      _
    $region61: #{simple_model_forward.1} parent=1 // pred_fallthru
      _
    // Predicated region
    $region62: #{simple_model_forward.1} parent=1 // pred_check
      _
    $region63: #{simple_model_forward.1} parent=1 // pred_check_branch
      %55 = sbr.rel (0) target = $region65
    $region64: #{simple_model_forward.1} parent=1 // pred_region
      _
    $region65: #{simple_model_forward.1} parent=1 // pred_fallthru
      _
    // Predicated region
    $region66: #{simple_model_forward.1} parent=1 // pred_check
      _
    $region67: #{simple_model_forward.1} parent=1 // pred_check_branch
      %57 = sbr.rel (0) target = $region69
    $region68: #{simple_model_forward.1} parent=1 // pred_region
      _
    $region69: #{simple_model_forward.1} parent=1 // pred_fallthru
      _
    // Predicated region
    $region70: #{simple_model_forward.1} parent=1 // pred_check
      _
    $region71: #{simple_model_forward.1} parent=1 // pred_check_branch
      %59 = sbr.rel (0) target = $region73
    $region72: #{simple_model_forward.1} parent=1 // pred_region
      _
    $region73: #{simple_model_forward.1} parent=1 // pred_fallthru
      _
    %v60 = vld [vmem:[%s0] sm:$0xff]
    %v61 = vld [vmem:[%s0 + $0x8] sm:$0xff]
    %vm62 = vcmask 130048
    %v63 = vsel %vm62, %v60, 0.0
    %64 = vadd.xlane.f32.xlu0 %v63
    %v65 = vpop.xlane.xlu0 %64
    %v66 = vsel %vm62, %v61, 0.0
    %67 = vadd.xlane.f32.xlu0 %v66
    %v68 = vpop.xlane.xlu0 %67
    %vm69 = vcmp.gt.f32.partialorder %v65, 0.0
    %vm70 = vcmp.gt.f32.partialorder %v68, 0.0
    %v71 = vmax.f32 %v65, 1e-12
    %v72 = vmax.f32 %v68, 1e-12
    %v73 = vrsqrt.pop %v71
    %v74 = vmul.f32 %v73, %v71
    %v75 = vmul.f32 %v74, %v73
    %v76 = vmul.f32 0.5, %v75
    %v77 = vsub.f32 1.5, %v76
    %v78 = vmul.f32 %v73, %v77
    %vm79 = vweird.f32 %v71
    %vm80 = vweird.f32 %v73
    %vm81 = vmor %vm79, %vm80
    %v82 = vsel %vm81, %v73, %v78
    %v83 = vrsqrt.pop %v72
    %v84 = vmul.f32 %v83, %v72
    %v85 = vmul.f32 %v84, %v83
    %v86 = vmul.f32 0.5, %v85
    %v87 = vsub.f32 1.5, %v86
    %v88 = vmul.f32 %v83, %v87
    %vm89 = vweird.f32 %v72
    %vm90 = vweird.f32 %v83
    %vm91 = vmor %vm89, %vm90
    %v92 = vsel %vm91, %v83, %v88
    %v93 = vsel %vm69, %v82, 0.0
    %v94 = vsel %vm70, %v92, 0.0
    %v95 = vrcp.pop %v65
    %v96 = vmul.f32 %v65, %v95
    %v97 = vsub.f32 1.0, %v96
    %v98 = vmul.f32 %v95, %v97
    %v99 = vadd.f32 %v95, %v98
    %vm100 = vweird.f32 %v65
    %vm101 = vweird.f32 %v95
    %vm102 = vmor %vm100, %vm101
    %v103 = vsel %vm102, %v95, %v99
    %v104 = vand.u32 2147483647, %v65
    %vm105 = vcmp.eq.f32.partialorder %v104, 8.507059e+37
    %v106 = vand.u32 %v65, 2147483648
    %v107 = vor.u32 1.1754944e-38, %v106
    %v108 = vsel %vm105, %v107, %v103
    %v109 = vmul.f32 1.0, %v108
    %v110 = vrcp.pop %v68
    %v111 = vmul.f32 %v68, %v110
    %v112 = vsub.f32 1.0, %v111
    %v113 = vmul.f32 %v110, %v112
    %v114 = vadd.f32 %v110, %v113
    %vm115 = vweird.f32 %v68
    %vm116 = vweird.f32 %v110
    %vm117 = vmor %vm115, %vm116
    %v118 = vsel %vm117, %v110, %v114
    %v119 = vand.u32 2147483647, %v68
    %vm120 = vcmp.eq.f32.partialorder %v119, 8.507059e+37
    %v121 = vand.u32 %v68, 2147483648
    %v122 = vor.u32 1.1754944e-38, %v121
    %v123 = vsel %vm120, %v122, %v118
    %v124 = vmul.f32 1.0, %v123
    %v125 = vsel %vm69, %v109, 0.0
    %v126 = vsel %vm70, %v124, 0.0
    %v127 = vld [vmem:[%s1] sm:$0xff]
    %v128 = vld [vmem:[%s1 + $0x8] sm:$0xff]
    %v129 = vmul.f32 %v127, %v93
    %v130 = vmul.f32 %v128, %v94
    %v132 = vsel %vm62, %v60, 0
    %v135 = vsel %vm62, %v61, 0
    %137 = vmatpush.msra.mxu0 0.0
    %138 = vmatpush.msra.mxu0 0.0
    %139 = vmatpush.msra.mxu0 0.0
    %140 = vmatpush.msra.mxu0 0.0
    %141 = vmatpush.msra.mxu0 0.0
    %142 = vmatpush.msra.mxu0 0.0
    %143 = vmatpush.msra.mxu0 0.0
    %144 = vmatpush.msra.mxu0 0.0
    %145 = vmatpush.msra.mxu0 0.0
    %146 = vmatpush.msra.mxu0 0.0
    %147 = vmatpush.msra.mxu0 0.0
    %148 = vmatpush.msra.mxu0 0.0
    %149 = vmatpush.msra.mxu0 0.0
    %150 = vmatpush.msra.mxu0 0.0
    %151 = vmatpush.msra.mxu0 %v130
    %152 = vmatpush.msra.mxu0 %v129
    %153 = vmatmul.f32.gmra.mxu0 %v132
    %v154 = vpop.f32.mrf.mxu0
    %v155 = vadd.f32 0.0, %v154
    %156 = vmatmul.f32.gmra.mxu0 %v135
    %v157 = vpop.f32.mrf.mxu0
    %v158 = vadd.f32 0.0, %v157
    %159 = vdwg.mxu0
    %v160 = vmul.f32 %v155, %v93
    %v161 = vmul.f32 %v158, %v94
    %v162 = vld [vmem:[%s2] sm:$0xff]
    %v163 = vld [vmem:[%s3] sm:$0x1]
    %v165 = vperm.slane %v163, 0
    %vm167 = vcmask 64512
    %v169 = vsel %vm167, %v160, 0
    %v172 = vsel %vm167, %v161, 0
    %174 = vmatpush.msra.mxu0 0.0
    %175 = vmatpush.msra.mxu0 0.0
    %176 = vmatpush.msra.mxu0 0.0
    %177 = vmatpush.msra.mxu0 0.0
    %178 = vmatpush.msra.mxu0 0.0
    %179 = vmatpush.msra.mxu0 0.0
    %180 = vmatpush.msra.mxu0 0.0
    %181 = vmatpush.msra.mxu0 0.0
    %182 = vmatpush.msra.mxu0 0.0
    %183 = vmatpush.msra.mxu0 0.0
    %184 = vmatpush.msra.mxu0 0.0
    %185 = vmatpush.msra.mxu0 0.0
    %186 = vmatpush.msra.mxu0 0.0
    %187 = vmatpush.msra.mxu0 0.0
    %188 = vmatpush.msra.mxu0 0.0
    %189 = vmatpush.msra.mxu0 %v162
    %190 = vmatmul.f32.gmra.mxu0 %v169
    %v191 = vpop.f32.mrf.mxu0
    %v192 = vadd.f32 %v165, %v191
    %193 = vmatmul.f32.gmra.mxu0 %v172
    %v194 = vpop.f32.mrf.mxu0
    %v195 = vadd.f32 %v165, %v194
    %196 = vdwg.mxu0
    %v197 = vmax.f32 %v192, 0.0
    %v198 = vmax.f32 %v195, 0.0
    %199 = vmatpush.msra.mxu0 0.0
    %200 = vmatpush.msra.mxu0 0.0
    %201 = vmatpush.msra.mxu0 0.0
    %202 = vmatpush.msra.mxu0 0.0
    %203 = vmatpush.msra.mxu0 0.0
    %204 = vmatpush.msra.mxu0 0.0
    %205 = vmatpush.msra.mxu0 0.0
    %206 = vmatpush.msra.mxu0 0.0
    %207 = vmatpush.msra.mxu0 0.0
    %208 = vmatpush.msra.mxu0 0.0
    %209 = vmatpush.msra.mxu0 0.0
    %210 = vmatpush.msra.mxu0 0.0
    %211 = vmatpush.msra.mxu0 0.0
    %212 = vmatpush.msra.mxu0 0.0
    %213 = vmatpush.msra.mxu0 %v198
    %214 = vmatpush.msra.mxu0 %v197
    %215 = vmatmul.f32.gmra.mxu0 %v132
    %v216 = vpop.f32.mrf.mxu0
    %v217 = vadd.f32 0.0, %v216
    %218 = vmatmul.f32.gmra.mxu0 %v135
    %v219 = vpop.f32.mrf.mxu0
    %v220 = vadd.f32 0.0, %v219
    %221 = vdwg.mxu0
    %v222 = vmul.f32 %v217, %v125
    %v223 = vmul.f32 %v220, %v126
    %v224 = vsub.f32 %v197, %v222
    %v225 = vsub.f32 %v198, %v223
    %v226 = vand.u32 2147483647, %v224
    %v227 = vand.u32 2147483647, %v225
    %vm228 = vcmask 261120
    %v230 = vsel %vm228, 1.0, 0
    %v233 = vsel %vm228, %v226, 0
    %v236 = vsel %vm228, %v227, 0
    %238 = vmatpush.xpose.msra.mxu0 0.0
    %239 = vmatpush.xpose.msra.mxu0 0.0
    %240 = vmatpush.xpose.msra.mxu0 0.0
    %241 = vmatpush.xpose.msra.mxu0 0.0
    %242 = vmatpush.xpose.msra.mxu0 0.0
    %243 = vmatpush.xpose.msra.mxu0 0.0
    %244 = vmatpush.xpose.msra.mxu0 0.0
    %245 = vmatpush.xpose.msra.mxu0 0.0
    %246 = vmatpush.xpose.msra.mxu0 0.0
    %247 = vmatpush.xpose.msra.mxu0 0.0
    %248 = vmatpush.xpose.msra.mxu0 0.0
    %249 = vmatpush.xpose.msra.mxu0 0.0
    %250 = vmatpush.xpose.msra.mxu0 0.0
    %251 = vmatpush.xpose.msra.mxu0 0.0
    %252 = vmatpush.xpose.msra.mxu0 %v236
    %253 = vmatpush.xpose.msra.mxu0 %v233
    %254 = vmatmul.f32.gmra.mxu0 %v230
    %v255 = vpop.f32.mrf.mxu0
    %v256 = vadd.f32 0.0, %v255
    %257 = vdwg.mxu0
    %v258 = vlaneseq
    %v259 = vand.u32 %v258, 127
    %vm260 = vcmask 122880
    %v261 = vsel %vm260, %v256, -inf
    %262 = vmax.xlane.f32.xlu0 %v261
    %v263 = vpop.xlane.xlu0 %262
    %vm264 = vcmp.eq.f32.partialorder %v256, %v263
    %v265 = vsel %vm264, %v259, 16
    %v266 = vsel %vm260, %v265, 2147483647
    %v267 = vand.u32 %v266, 65535
    %v268 = vshra.s32 %v266, 16
    %v269 = vcvt.s32.f32 %v267
    %v270 = vcvt.s32.f32 %v268
    %271 = vmin.xlane.f32.xlu0 %v270
    %v272 = vpop.xlane.xlu0 %271
    %vm273 = vcmp.eq.f32.partialorder %v270, %v272
    %v274 = vsel %vm273, %v269, inf
    %275 = vmin.xlane.f32.xlu0 %v274
    %v276 = vpop.xlane.xlu0 %275
    %v277 = vcvt.f32.s32 %v276
    %v278 = vcvt.f32.s32 %v272
    %v279 = vshll.u32 %v278, 16
    %v280 = vadd.s32 %v279, %v277
    %vm281 = vcmp.eq.s32.totalorder %v259, %v280
    %v282 = vsel %vm281, 1, 0
    %v283 = vcvt.s32.f32 %v282
    %284 = vst.msk [vmem:[#allocation2] sm:$0x1] %vm260, %v283
    %vm285 = vcmp.gt.f32.partialorder %v283, 0.0
    %v286 = vsel %vm285, -inf, %v256
    %v287 = vsel %vm260, %v286, -inf
    %288 = vmax.xlane.f32.xlu0 %v287
    %v289 = vpop.xlane.xlu0 %288
    %vm290 = vcmp.eq.f32.partialorder %v286, %v289
    %v291 = vsel %vm290, %v259, 16
    %v292 = vsel %vm260, %v291, 2147483647
    %v293 = vand.u32 %v292, 65535
    %v294 = vshra.s32 %v292, 16
    %v295 = vcvt.s32.f32 %v293
    %v296 = vcvt.s32.f32 %v294
    %297 = vmin.xlane.f32.xlu0 %v296
    %v298 = vpop.xlane.xlu0 %297
    %vm299 = vcmp.eq.f32.partialorder %v296, %v298
    %v300 = vsel %vm299, %v295, inf
    %301 = vmin.xlane.f32.xlu0 %v300
    %v302 = vpop.xlane.xlu0 %301
    %v303 = vcvt.f32.s32 %v302
    %v304 = vcvt.f32.s32 %v298
    %v305 = vshll.u32 %v304, 16
    %v306 = vadd.s32 %v305, %v303
    %vm307 = vcmp.eq.s32.totalorder %v259, %v306
    %v308 = vsel %vm307, 1, 0
    %v309 = vcvt.s32.f32 %v308
    %310 = vst.msk [vmem:[#allocation2 + $0x1] sm:$0x1] %vm260, %v309
    %vm311 = vcmp.gt.f32.partialorder %v309, 0.0
    %v312 = vsel %vm311, -inf, %v286
    %v313 = vsel %vm260, %v312, -inf
    %314 = vmax.xlane.f32.xlu0 %v313
    %v315 = vpop.xlane.xlu0 %314
    %vm316 = vcmp.eq.f32.partialorder %v312, %v315
    %v317 = vsel %vm316, %v259, 16
    %v318 = vsel %vm260, %v317, 2147483647
    %v319 = vand.u32 %v318, 65535
    %v320 = vshra.s32 %v318, 16
    %v321 = vcvt.s32.f32 %v319
    %v322 = vcvt.s32.f32 %v320
    %323 = vmin.xlane.f32.xlu0 %v322
    %v324 = vpop.xlane.xlu0 %323
    %vm325 = vcmp.eq.f32.partialorder %v322, %v324
    %v326 = vsel %vm325, %v321, inf
    %327 = vmin.xlane.f32.xlu0 %v326
    %v328 = vpop.xlane.xlu0 %327
    %v329 = vcvt.f32.s32 %v328
    %v330 = vcvt.f32.s32 %v324
    %v331 = vshll.u32 %v330, 16
    %v332 = vadd.s32 %v331, %v329
    %vm333 = vcmp.eq.s32.totalorder %v259, %v332
    %v334 = vsel %vm333, 1, 0
    %v335 = vcvt.s32.f32 %v334
    %336 = vst.msk [vmem:[#allocation2 + $0x2] sm:$0x1] %vm260, %v335
    %vm337 = vcmp.gt.f32.partialorder %v335, 0.0
    %v338 = vsel %vm337, -inf, %v312
    %v339 = vsel %vm260, %v338, -inf
    %340 = vmax.xlane.f32.xlu0 %v339
    %v341 = vpop.xlane.xlu0 %340
    %vm342 = vcmp.eq.f32.partialorder %v338, %v341
    %v343 = vsel %vm342, %v259, 16
    %v344 = vsel %vm260, %v343, 2147483647
    %v345 = vand.u32 %v344, 65535
    %v346 = vshra.s32 %v344, 16
    %v347 = vcvt.s32.f32 %v345
    %v348 = vcvt.s32.f32 %v346
    %349 = vmin.xlane.f32.xlu0 %v348
    %v350 = vpop.xlane.xlu0 %349
    %vm351 = vcmp.eq.f32.partialorder %v348, %v350
    %v352 = vsel %vm351, %v347, inf
    %353 = vmin.xlane.f32.xlu0 %v352
    %v354 = vpop.xlane.xlu0 %353
    %v355 = vcvt.f32.s32 %v354
    %v356 = vcvt.f32.s32 %v350
    %v357 = vshll.u32 %v356, 16
    %v358 = vadd.s32 %v357, %v355
    %vm359 = vcmp.eq.s32.totalorder %v259, %v358
    %v360 = vsel %vm359, 1, 0
    %v361 = vcvt.s32.f32 %v360
    %362 = vst.msk [vmem:[#allocation2 + $0x3] sm:$0x1] %vm260, %v361
    %vm363 = vcmp.gt.f32.partialorder %v361, 0.0
    %v364 = vsel %vm363, -inf, %v338
    %v365 = vsel %vm260, %v364, -inf
    %366 = vmax.xlane.f32.xlu0 %v365
    %v367 = vpop.xlane.xlu0 %366
    %vm368 = vcmp.eq.f32.partialorder %v364, %v367
    %v369 = vsel %vm368, %v259, 16
    %v370 = vsel %vm260, %v369, 2147483647
    %v371 = vand.u32 %v370, 65535
    %v372 = vshra.s32 %v370, 16
    %v373 = vcvt.s32.f32 %v371
    %v374 = vcvt.s32.f32 %v372
    %375 = vmin.xlane.f32.xlu0 %v374
    %v376 = vpop.xlane.xlu0 %375
    %vm377 = vcmp.eq.f32.partialorder %v374, %v376
    %v378 = vsel %vm377, %v373, inf
    %379 = vmin.xlane.f32.xlu0 %v378
    %v380 = vpop.xlane.xlu0 %379
    %v381 = vcvt.f32.s32 %v380
    %v382 = vcvt.f32.s32 %v376
    %v383 = vshll.u32 %v382, 16
    %v384 = vadd.s32 %v383, %v381
    %vm385 = vcmp.eq.s32.totalorder %v259, %v384
    %v386 = vsel %vm385, 1, 0
    %v387 = vcvt.s32.f32 %v386
    %388 = vst.msk [vmem:[#allocation2 + $0x4] sm:$0x1] %vm260, %v387
    %vm389 = vcmp.gt.f32.partialorder %v387, 0.0
    %v390 = vsel %vm389, -inf, %v364
    %v391 = vsel %vm260, %v390, -inf
    %392 = vmax.xlane.f32.xlu0 %v391
    %v393 = vpop.xlane.xlu0 %392
    %vm394 = vcmp.eq.f32.partialorder %v390, %v393
    %v395 = vsel %vm394, %v259, 16
    %v396 = vsel %vm260, %v395, 2147483647
    %v397 = vand.u32 %v396, 65535
    %v398 = vshra.s32 %v396, 16
    %v399 = vcvt.s32.f32 %v397
    %v400 = vcvt.s32.f32 %v398
    %401 = vmin.xlane.f32.xlu0 %v400
    %v402 = vpop.xlane.xlu0 %401
    %vm403 = vcmp.eq.f32.partialorder %v400, %v402
    %v404 = vsel %vm403, %v399, inf
    %405 = vmin.xlane.f32.xlu0 %v404
    %v406 = vpop.xlane.xlu0 %405
    %v407 = vcvt.f32.s32 %v406
    %v408 = vcvt.f32.s32 %v402
    %v409 = vshll.u32 %v408, 16
    %v410 = vadd.s32 %v409, %v407
    %vm411 = vcmp.eq.s32.totalorder %v259, %v410
    %v412 = vsel %vm411, 1, 0
    %v413 = vcvt.s32.f32 %v412
    %414 = vst.msk [vmem:[#allocation2 + $0x5] sm:$0x1] %vm260, %v413
    %vm415 = vcmp.gt.f32.partialorder %v413, 0.0
    %v416 = vsel %vm415, -inf, %v390
    %v417 = vsel %vm260, %v416, -inf
    %418 = vmax.xlane.f32.xlu0 %v417
    %v419 = vpop.xlane.xlu0 %418
    %vm420 = vcmp.eq.f32.partialorder %v416, %v419
    %v421 = vsel %vm420, %v259, 16
    %v422 = vsel %vm260, %v421, 2147483647
    %v423 = vand.u32 %v422, 65535
    %v424 = vshra.s32 %v422, 16
    %v425 = vcvt.s32.f32 %v423
    %v426 = vcvt.s32.f32 %v424
    %427 = vmin.xlane.f32.xlu0 %v426
    %v428 = vpop.xlane.xlu0 %427
    %vm429 = vcmp.eq.f32.partialorder %v426, %v428
    %v430 = vsel %vm429, %v425, inf
    %431 = vmin.xlane.f32.xlu0 %v430
    %v432 = vpop.xlane.xlu0 %431
    %v433 = vcvt.f32.s32 %v432
    %v434 = vcvt.f32.s32 %v428
    %v435 = vshll.u32 %v434, 16
    %v436 = vadd.s32 %v435, %v433
    %vm437 = vcmp.eq.s32.totalorder %v259, %v436
    %v438 = vsel %vm437, 1, 0
    %v439 = vcvt.s32.f32 %v438
    %440 = vst.msk [vmem:[#allocation2 + $0x6] sm:$0x1] %vm260, %v439
    %vm441 = vcmp.gt.f32.partialorder %v439, 0.0
    %v442 = vsel %vm441, -inf, %v416
    %v443 = vsel %vm260, %v442, -inf
    %444 = vmax.xlane.f32.xlu0 %v443
    %v445 = vpop.xlane.xlu0 %444
    %vm446 = vcmp.eq.f32.partialorder %v442, %v445
    %v447 = vsel %vm446, %v259, 16
    %v448 = vsel %vm260, %v447, 2147483647
    %v449 = vand.u32 %v448, 65535
    %v450 = vshra.s32 %v448, 16
    %v451 = vcvt.s32.f32 %v449
    %v452 = vcvt.s32.f32 %v450
    %453 = vmin.xlane.f32.xlu0 %v452
    %v454 = vpop.xlane.xlu0 %453
    %vm455 = vcmp.eq.f32.partialorder %v452, %v454
    %v456 = vsel %vm455, %v451, inf
    %457 = vmin.xlane.f32.xlu0 %v456
    %v458 = vpop.xlane.xlu0 %457
    %v459 = vcvt.f32.s32 %v458
    %v460 = vcvt.f32.s32 %v454
    %v461 = vshll.u32 %v460, 16
    %v462 = vadd.s32 %v461, %v459
    %vm463 = vcmp.eq.s32.totalorder %v259, %v462
    %v464 = vsel %vm463, 1, 0
    %v465 = vcvt.s32.f32 %v464
    %466 = vst.msk [vmem:[#allocation2 + $0x7] sm:$0x1] %vm260, %v465
    %v467 = vld [vmem:[#allocation2] sm:$0xff]
    %v469 = vsel %vm62, %v467, 0
    %471 = vmatpush.msra.mxu0 0.0
    %472 = vmatpush.msra.mxu0 0.0
    %473 = vmatpush.msra.mxu0 0.0
    %474 = vmatpush.msra.mxu0 0.0
    %475 = vmatpush.msra.mxu0 0.0
    %476 = vmatpush.msra.mxu0 0.0
    %477 = vmatpush.msra.mxu0 0.0
    %478 = vmatpush.msra.mxu0 0.0
    %479 = vmatpush.msra.mxu0 0.0
    %480 = vmatpush.msra.mxu0 0.0
    %481 = vmatpush.msra.mxu0 0.0
    %482 = vmatpush.msra.mxu0 0.0
    %483 = vmatpush.msra.mxu0 0.0
    %484 = vmatpush.msra.mxu0 0.0
    %485 = vmatpush.msra.mxu0 %v198
    %486 = vmatpush.msra.mxu0 %v197
    %487 = vmatmul.f32.gmra.mxu0 %v469
    %v488 = vpop.f32.mrf.mxu0
    %v489 = vadd.f32 0.0, %v488
    %490 = vdwg.mxu0
    %491 = vmatpush.msra.mxu0 0.0
    %492 = vmatpush.msra.mxu0 0.0
    %493 = vmatpush.msra.mxu0 0.0
    %494 = vmatpush.msra.mxu0 0.0
    %495 = vmatpush.msra.mxu0 0.0
    %496 = vmatpush.msra.mxu0 0.0
    %497 = vmatpush.msra.mxu0 0.0
    %498 = vmatpush.msra.mxu0 0.0
    %499 = vmatpush.msra.mxu0 0.0
    %500 = vmatpush.msra.mxu0 0.0
    %501 = vmatpush.msra.mxu0 0.0
    %502 = vmatpush.msra.mxu0 0.0
    %503 = vmatpush.msra.mxu0 0.0
    %504 = vmatpush.msra.mxu0 0.0
    %505 = vmatpush.msra.mxu0 %v61
    %506 = vmatpush.msra.mxu0 %v60
    %507 = vmatmul.f32.gmra.mxu0 %v469
    %v508 = vpop.f32.mrf.mxu0
    %v509 = vadd.f32 0.0, %v508
    %510 = vdwg.mxu0
    %v512 = vsel %vm62, %v509, 0
    %514 = vmatpush.xpose.msra.mxu0 0.0
    %515 = vmatpush.xpose.msra.mxu0 0.0
    %516 = vmatpush.xpose.msra.mxu0 0.0
    %517 = vmatpush.xpose.msra.mxu0 0.0
    %518 = vmatpush.xpose.msra.mxu0 0.0
    %519 = vmatpush.xpose.msra.mxu0 0.0
    %520 = vmatpush.xpose.msra.mxu0 0.0
    %521 = vmatpush.xpose.msra.mxu0 0.0
    %522 = vmatpush.xpose.msra.mxu0 0.0
    %523 = vmatpush.xpose.msra.mxu0 0.0
    %524 = vmatpush.xpose.msra.mxu0 0.0
    %525 = vmatpush.xpose.msra.mxu0 0.0
    %526 = vmatpush.xpose.msra.mxu0 0.0
    %527 = vmatpush.xpose.msra.mxu0 0.0
    %528 = vmatpush.xpose.msra.mxu0 0.0
    %529 = vmatpush.xpose.msra.mxu0 %v469
    %530 = vmatmul.f32.gmra.mxu0 %v512
    %v531 = vpop.f32.mrf.mxu0
    %v532 = vadd.f32 0.0, %v531
    %533 = vdwg.mxu0
    %v534 = vld [vmem:[%s8] sm:$0x1]
    %v535 = vld [vmem:[%s9] sm:$0x1]
    %v537 = vperm.slane %v534, 0
    %v539 = vmul.f32 %v489, %v537
    %v540 = vsel %vm228, %v539, 0.0
    %541 = vadd.xlane.f32.xlu0 %v540
    %v542 = vpop.xlane.xlu0 %541
    %v544 = vsel %vm228, %v535, 0
    %v547 = vsel %vm228, %v489, 0
    %549 = vmatpush.xpose.msra.mxu0 0.0
    %550 = vmatpush.xpose.msra.mxu0 0.0
    %551 = vmatpush.xpose.msra.mxu0 0.0
    %552 = vmatpush.xpose.msra.mxu0 0.0
    %553 = vmatpush.xpose.msra.mxu0 0.0
    %554 = vmatpush.xpose.msra.mxu0 0.0
    %555 = vmatpush.xpose.msra.mxu0 0.0
    %556 = vmatpush.xpose.msra.mxu0 0.0
    %557 = vmatpush.xpose.msra.mxu0 0.0
    %558 = vmatpush.xpose.msra.mxu0 0.0
    %559 = vmatpush.xpose.msra.mxu0 0.0
    %560 = vmatpush.xpose.msra.mxu0 0.0
    %561 = vmatpush.xpose.msra.mxu0 0.0
    %562 = vmatpush.xpose.msra.mxu0 0.0
    %563 = vmatpush.xpose.msra.mxu0 0.0
    %564 = vmatpush.xpose.msra.mxu0 %v547
    %565 = vmatmul.f32.gmra.mxu0 %v544
    %v566 = vpop.f32.mrf.mxu0
    %v567 = vadd.f32 0.0, %v566
    %568 = vdwg.mxu0
    %v569 = vperm.slane %v567, 0
    %v570 = vadd.f32 %v542, %v569
    %v571 = vmax.f32 %v570, 0.0
    %v572 = vadd.f32 %v571, %v532
    %v573 = vsel %vm167, %v572, -inf
    %574 = vmax.xlane.f32.xlu0 %v573
    %v575 = vpop.xlane.xlu0 %574
    %v576 = vsub.f32 %v572, %v575
    %v577 = vmul.f32 %v576, 1.442695
    %v578 = vpow.pop %v577
    %v579 = vsel %vm167, %v578, 0.0
    %580 = vadd.xlane.f32.xlu0 %v579
    %v581 = vpop.xlane.xlu0 %580
    %v582 = vrcp.pop %v581
    %v583 = vmul.f32 %v581, %v582
    %v584 = vsub.f32 1.0, %v583
    %v585 = vmul.f32 %v582, %v584
    %v586 = vadd.f32 %v582, %v585
    %vm587 = vweird.f32 %v581
    %vm588 = vweird.f32 %v582
    %vm589 = vmor %vm587, %vm588
    %v590 = vsel %vm589, %v582, %v586
    %v591 = vand.u32 2147483647, %v581
    %vm592 = vcmp.eq.f32.partialorder %v591, 8.507059e+37
    %v593 = vand.u32 %v581, 2147483648
    %v594 = vor.u32 1.1754944e-38, %v593
    %v595 = vsel %vm592, %v594, %v590
    %v596 = vmul.f32 %v578, %v595
    %v597 = vsel %vm228, %v489, 0.0
    %v598 = vrot.slane %v597, 4
    %v599 = vadd.f32 %v597, %v598
    %v600 = vrot.slane %v599, 2
    %v601 = vadd.f32 %v599, %v600
    %v602 = vrot.slane %v601, 1
    %v603 = vadd.f32 %v601, %v602
    %v604 = vrcp.pop 8.0
    %v605 = vmul.f32 8.0, %v604
    %v606 = vsub.f32 1.0, %v605
    %v607 = vmul.f32 %v604, %v606
    %v608 = vadd.f32 %v604, %v607
    %vm609 = vweird.f32 %v604
    %v610 = vsel %vm609, %v604, %v608
    %v611 = vmul.f32 %v603, %v610
    %v612 = vsel %vm228, %v489, -inf
    %v613 = vrot.slane %v612, 4
    %v614 = vmax.f32 %v612, %v613
    %v615 = vrot.slane %v614, 2
    %v616 = vmax.f32 %v614, %v615
    %v617 = vrot.slane %v616, 1
    %v618 = vmax.f32 %v616, %v617
    %v619 = vld [vmem:[%s4] sm:$0xff]
    %v620 = vld [vmem:[%s4 + $0x8] sm:$0xff]
    %v621 = vld [vmem:[%s4 + $0x10] sm:$0xff]
    %v622 = vld [vmem:[%s4 + $0x18] sm:$0xff]
    %v623 = vld [vmem:[%s5] sm:$0x1]
    %v624 = vsel %vm167, %v596, 0.0
    %625 = vadd.xlane.f32.xlu0 %v624
    %v626 = vpop.xlane.xlu0 %625
    %vm627 = vcmp.gt.f32.partialorder %v626, 0.0
    %v628 = vmax.f32 %v626, 1e-12
    %v629 = vrsqrt.pop %v628
    %v630 = vmul.f32 %v629, %v628
    %v631 = vmul.f32 %v630, %v629
    %v632 = vmul.f32 0.5, %v631
    %v633 = vsub.f32 1.5, %v632
    %v634 = vmul.f32 %v629, %v633
    %vm635 = vweird.f32 %v628
    %vm636 = vweird.f32 %v629
    %vm637 = vmor %vm635, %vm636
    %v638 = vsel %vm637, %v629, %v634
    %v639 = vsel %vm627, %v638, 0.0
    %v640 = vmul.f32 %v489, %v639
    %v642 = vsel %vm167, %v596, 0
    %644 = vmatpush.msra.mxu0 0.0
    %645 = vmatpush.msra.mxu0 0.0
    %646 = vmatpush.msra.mxu0 0.0
    %647 = vmatpush.msra.mxu0 0.0
    %648 = vmatpush.msra.mxu0 0.0
    %649 = vmatpush.msra.mxu0 0.0
    %650 = vmatpush.msra.mxu0 0.0
    %651 = vmatpush.msra.mxu0 0.0
    %652 = vmatpush.msra.mxu0 0.0
    %653 = vmatpush.msra.mxu0 0.0
    %654 = vmatpush.msra.mxu0 0.0
    %655 = vmatpush.msra.mxu0 0.0
    %656 = vmatpush.msra.mxu0 0.0
    %657 = vmatpush.msra.mxu0 0.0
    %658 = vmatpush.msra.mxu0 0.0
    %659 = vmatpush.msra.mxu0 %v640
    %660 = vmatmul.f32.gmra.mxu0 %v642
    %v661 = vpop.f32.mrf.mxu0
    %v662 = vadd.f32 0.0, %v661
    %663 = vdwg.mxu0
    %v664 = vmul.f32 %v662, %v639
    %v666 = vperm.slane %v623, 0
    %v669 = vsel %vm228, %v664, 0
    %671 = vmatpush.msra.mxu0 0.0
    %672 = vmatpush.msra.mxu0 0.0
    %673 = vmatpush.msra.mxu0 0.0
    %674 = vmatpush.msra.mxu0 0.0
    %675 = vmatpush.msra.mxu0 0.0
    %676 = vmatpush.msra.mxu0 0.0
    %677 = vmatpush.msra.mxu0 0.0
    %678 = vmatpush.msra.mxu0 0.0
    %679 = vmatpush.msra.mxu0 0.0
    %680 = vmatpush.msra.mxu0 0.0
    %681 = vmatpush.msra.mxu0 0.0
    %682 = vmatpush.msra.mxu0 0.0
    %683 = vmatpush.msra.mxu0 %v622
    %684 = vmatpush.msra.mxu0 %v621
    %685 = vmatpush.msra.mxu0 %v620
    %686 = vmatpush.msra.mxu0 %v619
    %687 = vmatmul.f32.gmra.mxu0 %v669
    %v688 = vpop.f32.mrf.mxu0
    %v689 = vadd.f32 %v666, %v688
    %690 = vdwg.mxu0
    %v691 = vmax.f32 %v689, 0.0
    %v692 = vrcp.pop %v626
    %v693 = vmul.f32 %v626, %v692
    %v694 = vsub.f32 1.0, %v693
    %v695 = vmul.f32 %v692, %v694
    %v696 = vadd.f32 %v692, %v695
    %vm697 = vweird.f32 %v626
    %vm698 = vweird.f32 %v692
    %vm699 = vmor %vm697, %vm698
    %v700 = vsel %vm699, %v692, %v696
    %v701 = vand.u32 2147483647, %v626
    %vm702 = vcmp.eq.f32.partialorder %v701, 8.507059e+37
    %v703 = vand.u32 %v626, 2147483648
    %v704 = vor.u32 1.1754944e-38, %v703
    %v705 = vsel %vm702, %v704, %v700
    %v706 = vmul.f32 1.0, %v705
    %v707 = vsel %vm627, %v706, 0.0
    %708 = vmatpush.msra.mxu0 0.0
    %709 = vmatpush.msra.mxu0 0.0
    %710 = vmatpush.msra.mxu0 0.0
    %711 = vmatpush.msra.mxu0 0.0
    %712 = vmatpush.msra.mxu0 0.0
    %713 = vmatpush.msra.mxu0 0.0
    %714 = vmatpush.msra.mxu0 0.0
    %715 = vmatpush.msra.mxu0 0.0
    %716 = vmatpush.msra.mxu0 0.0
    %717 = vmatpush.msra.mxu0 0.0
    %718 = vmatpush.msra.mxu0 0.0
    %719 = vmatpush.msra.mxu0 0.0
    %720 = vmatpush.msra.mxu0 0.0
    %721 = vmatpush.msra.mxu0 0.0
    %722 = vmatpush.msra.mxu0 0.0
    %723 = vmatpush.msra.mxu0 %v691
    %724 = vmatmul.f32.gmra.mxu0 %v642
    %v725 = vpop.f32.mrf.mxu0
    %v726 = vadd.f32 0.0, %v725
    %727 = vdwg.mxu0
    %v728 = vmul.f32 %v726, %v707
    %v729 = vsub.f32 %v691, %v728
    %v730 = vand.u32 2147483647, %v729
    %v732 = vsel %vm228, %v730, 0
    %734 = vmatpush.xpose.msra.mxu0 0.0
    %735 = vmatpush.xpose.msra.mxu0 0.0
    %736 = vmatpush.xpose.msra.mxu0 0.0
    %737 = vmatpush.xpose.msra.mxu0 0.0
    %738 = vmatpush.xpose.msra.mxu0 0.0
    %739 = vmatpush.xpose.msra.mxu0 0.0
    %740 = vmatpush.xpose.msra.mxu0 0.0
    %741 = vmatpush.xpose.msra.mxu0 0.0
    %742 = vmatpush.xpose.msra.mxu0 0.0
    %743 = vmatpush.xpose.msra.mxu0 0.0
    %744 = vmatpush.xpose.msra.mxu0 0.0
    %745 = vmatpush.xpose.msra.mxu0 0.0
    %746 = vmatpush.xpose.msra.mxu0 0.0
    %747 = vmatpush.xpose.msra.mxu0 0.0
    %748 = vmatpush.xpose.msra.mxu0 0.0
    %749 = vmatpush.xpose.msra.mxu0 %v732
    %750 = vmatmul.f32.gmra.mxu0 %v230
    %v751 = vpop.f32.mrf.mxu0
    %v752 = vadd.f32 0.0, %v751
    %753 = vdwg.mxu0
    %vm754 = vcmask 57344
    %v755 = vsel %vm754, %v752, -inf
    %756 = vmax.xlane.f32.xlu0 %v755
    %v757 = vpop.xlane.xlu0 %756
    %vm758 = vcmp.eq.f32.partialorder %v752, %v757
    %v759 = vsel %vm758, %v259, 8
    %v760 = vsel %vm754, %v759, 2147483647
    %v761 = vand.u32 %v760, 65535
    %v762 = vshra.s32 %v760, 16
    %v763 = vcvt.s32.f32 %v761
    %v764 = vcvt.s32.f32 %v762
    %765 = vmin.xlane.f32.xlu0 %v764
    %v766 = vpop.xlane.xlu0 %765
    %vm767 = vcmp.eq.f32.partialorder %v764, %v766
    %v768 = vsel %vm767, %v763, inf
    %769 = vmin.xlane.f32.xlu0 %v768
    %v770 = vpop.xlane.xlu0 %769
    %v771 = vcvt.f32.s32 %v770
    %v772 = vcvt.f32.s32 %v766
    %v773 = vshll.u32 %v772, 16
    %v774 = vadd.s32 %v773, %v771
    %vm775 = vcmp.eq.s32.totalorder %v259, %v774
    %v776 = vsel %vm775, 1, 0
    %v777 = vcvt.s32.f32 %v776
    %778 = vst.msk [vmem:[#allocation3] sm:$0x1] %vm754, %v777
    %vm779 = vcmp.gt.f32.partialorder %v777, 0.0
    %v780 = vsel %vm779, -inf, %v752
    %v781 = vsel %vm754, %v780, -inf
    %782 = vmax.xlane.f32.xlu0 %v781
    %v783 = vpop.xlane.xlu0 %782
    %vm784 = vcmp.eq.f32.partialorder %v780, %v783
    %v785 = vsel %vm784, %v259, 8
    %v786 = vsel %vm754, %v785, 2147483647
    %v787 = vand.u32 %v786, 65535
    %v788 = vshra.s32 %v786, 16
    %v789 = vcvt.s32.f32 %v787
    %v790 = vcvt.s32.f32 %v788
    %791 = vmin.xlane.f32.xlu0 %v790
    %v792 = vpop.xlane.xlu0 %791
    %vm793 = vcmp.eq.f32.partialorder %v790, %v792
    %v794 = vsel %vm793, %v789, inf
    %795 = vmin.xlane.f32.xlu0 %v794
    %v796 = vpop.xlane.xlu0 %795
    %v797 = vcvt.f32.s32 %v796
    %v798 = vcvt.f32.s32 %v792
    %v799 = vshll.u32 %v798, 16
    %v800 = vadd.s32 %v799, %v797
    %vm801 = vcmp.eq.s32.totalorder %v259, %v800
    %v802 = vsel %vm801, 1, 0
    %v803 = vcvt.s32.f32 %v802
    %804 = vst.msk [vmem:[#allocation3 + $0x1] sm:$0x1] %vm754, %v803
    %vm805 = vcmp.gt.f32.partialorder %v803, 0.0
    %v806 = vsel %vm805, -inf, %v780
    %v807 = vsel %vm754, %v806, -inf
    %808 = vmax.xlane.f32.xlu0 %v807
    %v809 = vpop.xlane.xlu0 %808
    %vm810 = vcmp.eq.f32.partialorder %v806, %v809
    %v811 = vsel %vm810, %v259, 8
    %v812 = vsel %vm754, %v811, 2147483647
    %v813 = vand.u32 %v812, 65535
    %v814 = vshra.s32 %v812, 16
    %v815 = vcvt.s32.f32 %v813
    %v816 = vcvt.s32.f32 %v814
    %817 = vmin.xlane.f32.xlu0 %v816
    %v818 = vpop.xlane.xlu0 %817
    %vm819 = vcmp.eq.f32.partialorder %v816, %v818
    %v820 = vsel %vm819, %v815, inf
    %821 = vmin.xlane.f32.xlu0 %v820
    %v822 = vpop.xlane.xlu0 %821
    %v823 = vcvt.f32.s32 %v822
    %v824 = vcvt.f32.s32 %v818
    %v825 = vshll.u32 %v824, 16
    %v826 = vadd.s32 %v825, %v823
    %vm827 = vcmp.eq.s32.totalorder %v259, %v826
    %v828 = vsel %vm827, 1, 0
    %v829 = vcvt.s32.f32 %v828
    %830 = vst.msk [vmem:[#allocation3 + $0x2] sm:$0x1] %vm754, %v829
    %vm831 = vcmp.gt.f32.partialorder %v829, 0.0
    %v832 = vsel %vm831, -inf, %v806
    %v833 = vsel %vm754, %v832, -inf
    %834 = vmax.xlane.f32.xlu0 %v833
    %v835 = vpop.xlane.xlu0 %834
    %vm836 = vcmp.eq.f32.partialorder %v832, %v835
    %v837 = vsel %vm836, %v259, 8
    %v838 = vsel %vm754, %v837, 2147483647
    %v839 = vand.u32 %v838, 65535
    %v840 = vshra.s32 %v838, 16
    %v841 = vcvt.s32.f32 %v839
    %v842 = vcvt.s32.f32 %v840
    %843 = vmin.xlane.f32.xlu0 %v842
    %v844 = vpop.xlane.xlu0 %843
    %vm845 = vcmp.eq.f32.partialorder %v842, %v844
    %v846 = vsel %vm845, %v841, inf
    %847 = vmin.xlane.f32.xlu0 %v846
    %v848 = vpop.xlane.xlu0 %847
    %v849 = vcvt.f32.s32 %v848
    %v850 = vcvt.f32.s32 %v844
    %v851 = vshll.u32 %v850, 16
    %v852 = vadd.s32 %v851, %v849
    %vm853 = vcmp.eq.s32.totalorder %v259, %v852
    %v854 = vsel %vm853, 1, 0
    %v855 = vcvt.s32.f32 %v854
    %856 = vst.msk [vmem:[#allocation3 + $0x3] sm:$0x1] %vm754, %v855
    %v857 = vld [vmem:[#allocation3] sm:$0xf]
    %v859 = vsel %vm167, %v857, 0
    %861 = vmatpush.msra.mxu0 0.0
    %862 = vmatpush.msra.mxu0 0.0
    %863 = vmatpush.msra.mxu0 0.0
    %864 = vmatpush.msra.mxu0 0.0
    %865 = vmatpush.msra.mxu0 0.0
    %866 = vmatpush.msra.mxu0 0.0
    %867 = vmatpush.msra.mxu0 0.0
    %868 = vmatpush.msra.mxu0 0.0
    %869 = vmatpush.msra.mxu0 0.0
    %870 = vmatpush.msra.mxu0 0.0
    %871 = vmatpush.msra.mxu0 0.0
    %872 = vmatpush.msra.mxu0 0.0
    %873 = vmatpush.msra.mxu0 0.0
    %874 = vmatpush.msra.mxu0 0.0
    %875 = vmatpush.msra.mxu0 0.0
    %876 = vmatpush.msra.mxu0 %v691
    %877 = vmatmul.f32.gmra.mxu0 %v859
    %v878 = vpop.f32.mrf.mxu0
    %v879 = vadd.f32 0.0, %v878
    %880 = vdwg.mxu0
    %881 = vmatpush.msra.mxu0 0.0
    %882 = vmatpush.msra.mxu0 0.0
    %883 = vmatpush.msra.mxu0 0.0
    %884 = vmatpush.msra.mxu0 0.0
    %885 = vmatpush.msra.mxu0 0.0
    %886 = vmatpush.msra.mxu0 0.0
    %887 = vmatpush.msra.mxu0 0.0
    %888 = vmatpush.msra.mxu0 0.0
    %889 = vmatpush.msra.mxu0 0.0
    %890 = vmatpush.msra.mxu0 0.0
    %891 = vmatpush.msra.mxu0 0.0
    %892 = vmatpush.msra.mxu0 0.0
    %893 = vmatpush.msra.mxu0 0.0
    %894 = vmatpush.msra.mxu0 0.0
    %895 = vmatpush.msra.mxu0 0.0
    %896 = vmatpush.msra.mxu0 %v596
    %897 = vmatmul.f32.gmra.mxu0 %v859
    %v898 = vpop.f32.mrf.mxu0
    %v899 = vadd.f32 0.0, %v898
    %900 = vdwg.mxu0
    %v902 = vsel %vm167, %v899, 0
    %904 = vmatpush.xpose.msra.mxu0 0.0
    %905 = vmatpush.xpose.msra.mxu0 0.0
    %906 = vmatpush.xpose.msra.mxu0 0.0
    %907 = vmatpush.xpose.msra.mxu0 0.0
    %908 = vmatpush.xpose.msra.mxu0 0.0
    %909 = vmatpush.xpose.msra.mxu0 0.0
    %910 = vmatpush.xpose.msra.mxu0 0.0
    %911 = vmatpush.xpose.msra.mxu0 0.0
    %912 = vmatpush.xpose.msra.mxu0 0.0
    %913 = vmatpush.xpose.msra.mxu0 0.0
    %914 = vmatpush.xpose.msra.mxu0 0.0
    %915 = vmatpush.xpose.msra.mxu0 0.0
    %916 = vmatpush.xpose.msra.mxu0 0.0
    %917 = vmatpush.xpose.msra.mxu0 0.0
    %918 = vmatpush.xpose.msra.mxu0 0.0
    %919 = vmatpush.xpose.msra.mxu0 %v859
    %920 = vmatmul.f32.gmra.mxu0 %v902
    %v921 = vpop.f32.mrf.mxu0
    %v922 = vadd.f32 0.0, %v921
    %923 = vdwg.mxu0
    %v924 = vld [vmem:[%s10] sm:$0x1]
    %v925 = vld [vmem:[%s11] sm:$0x1]
    %v927 = vperm.slane %v924, 0
    %v929 = vmul.f32 %v879, %v927
    %vm930 = vcmask 257024
    %v931 = vsel %vm930, %v929, 0.0
    %932 = vadd.xlane.f32.xlu0 %v931
    %v933 = vpop.xlane.xlu0 %932
    %v935 = vsel %vm228, %v925, 0
    %v938 = vsel %vm228, %v879, 0
    %940 = vmatpush.xpose.msra.mxu0 0.0
    %941 = vmatpush.xpose.msra.mxu0 0.0
    %942 = vmatpush.xpose.msra.mxu0 0.0
    %943 = vmatpush.xpose.msra.mxu0 0.0
    %944 = vmatpush.xpose.msra.mxu0 0.0
    %945 = vmatpush.xpose.msra.mxu0 0.0
    %946 = vmatpush.xpose.msra.mxu0 0.0
    %947 = vmatpush.xpose.msra.mxu0 0.0
    %948 = vmatpush.xpose.msra.mxu0 0.0
    %949 = vmatpush.xpose.msra.mxu0 0.0
    %950 = vmatpush.xpose.msra.mxu0 0.0
    %951 = vmatpush.xpose.msra.mxu0 0.0
    %952 = vmatpush.xpose.msra.mxu0 0.0
    %953 = vmatpush.xpose.msra.mxu0 0.0
    %954 = vmatpush.xpose.msra.mxu0 0.0
    %955 = vmatpush.xpose.msra.mxu0 %v938
    %956 = vmatmul.f32.gmra.mxu0 %v935
    %v957 = vpop.f32.mrf.mxu0
    %v958 = vadd.f32 0.0, %v957
    %959 = vdwg.mxu0
    %v960 = vperm.slane %v958, 0
    %v961 = vadd.f32 %v933, %v960
    %v962 = vmax.f32 %v961, 0.0
    %v963 = vadd.f32 %v962, %v922
    %vm964 = vcmask 27648
    %v965 = vsel %vm964, %v963, -inf
    %966 = vmax.xlane.f32.xlu0 %v965
    %v967 = vpop.xlane.xlu0 %966
    %v968 = vsub.f32 %v963, %v967
    %v969 = vmul.f32 %v968, 1.442695
    %v970 = vpow.pop %v969
    %v971 = vsel %vm964, %v970, 0.0
    %972 = vadd.xlane.f32.xlu0 %v971
    %v973 = vpop.xlane.xlu0 %972
    %v974 = vrcp.pop %v973
    %v975 = vmul.f32 %v973, %v974
    %v976 = vsub.f32 1.0, %v975
    %v977 = vmul.f32 %v974, %v976
    %v978 = vadd.f32 %v974, %v977
    %vm979 = vweird.f32 %v973
    %vm980 = vweird.f32 %v974
    %vm981 = vmor %vm979, %vm980
    %v982 = vsel %vm981, %v974, %v978
    %v983 = vand.u32 2147483647, %v973
    %vm984 = vcmp.eq.f32.partialorder %v983, 8.507059e+37
    %v985 = vand.u32 %v973, 2147483648
    %v986 = vor.u32 1.1754944e-38, %v985
    %v987 = vsel %vm984, %v986, %v982
    %v988 = vmul.f32 %v970, %v987
    %v989 = vsel %vm930, %v879, 0.0
    %v990 = vrot.slane %v989, 4
    %v991 = vadd.f32 %v989, %v990
    %v992 = vrot.slane %v991, 2
    %v993 = vadd.f32 %v991, %v992
    %v994 = vrot.slane %v993, 1
    %v995 = vadd.f32 %v993, %v994
    %v996 = vrcp.pop 4.0
    %v997 = vmul.f32 4.0, %v996
    %v998 = vsub.f32 1.0, %v997
    %v999 = vmul.f32 %v996, %v998
    %v1000 = vadd.f32 %v996, %v999
    %vm1001 = vweird.f32 %v996
    %v1002 = vsel %vm1001, %v996, %v1000
    %v1003 = vmul.f32 %v995, %v1002
    %v1004 = vadd.f32 %v611, %v1003
    %v1005 = vsel %vm930, %v879, -inf
    %v1006 = vrot.slane %v1005, 4
    %v1007 = vmax.f32 %v1005, %v1006
    %v1008 = vrot.slane %v1007, 2
    %v1009 = vmax.f32 %v1007, %v1008
    %v1010 = vrot.slane %v1009, 1
    %v1011 = vmax.f32 %v1009, %v1010
    %v1012 = vadd.f32 %v618, %v1011
    %v1013 = vld [vmem:[%s6] sm:$0xff]
    %v1014 = vld [vmem:[%s6 + $0x8] sm:$0xff]
    %v1015 = vld [vmem:[%s6 + $0x10] sm:$0xff]
    %v1016 = vld [vmem:[%s6 + $0x18] sm:$0xff]
    %v1017 = vld [vmem:[%s7] sm:$0x1]
    %v1018 = vsel %vm964, %v988, 0.0
    %1019 = vadd.xlane.f32.xlu0 %v1018
    %v1020 = vpop.xlane.xlu0 %1019
    %vm1021 = vcmp.gt.f32.partialorder %v1020, 0.0
    %v1022 = vmax.f32 %v1020, 1e-12
    %v1023 = vrsqrt.pop %v1022
    %v1024 = vmul.f32 %v1023, %v1022
    %v1025 = vmul.f32 %v1024, %v1023
    %v1026 = vmul.f32 0.5, %v1025
    %v1027 = vsub.f32 1.5, %v1026
    %v1028 = vmul.f32 %v1023, %v1027
    %vm1029 = vweird.f32 %v1022
    %vm1030 = vweird.f32 %v1023
    %vm1031 = vmor %vm1029, %vm1030
    %v1032 = vsel %vm1031, %v1023, %v1028
    %v1033 = vsel %vm1021, %v1032, 0.0
    %v1034 = vmul.f32 %v879, %v1033
    %vm1035 = vcmask 31744
    %v1037 = vsel %vm1035, %v988, 0
    %vm1039 = vcmask 1043456
    %v1041 = vsel %vm1039, %v1034, 0
    %1043 = vmatpush.msra.mxu0 0.0
    %1044 = vmatpush.msra.mxu0 0.0
    %1045 = vmatpush.msra.mxu0 0.0
    %1046 = vmatpush.msra.mxu0 0.0
    %1047 = vmatpush.msra.mxu0 0.0
    %1048 = vmatpush.msra.mxu0 0.0
    %1049 = vmatpush.msra.mxu0 0.0
    %1050 = vmatpush.msra.mxu0 0.0
    %1051 = vmatpush.msra.mxu0 0.0
    %1052 = vmatpush.msra.mxu0 0.0
    %1053 = vmatpush.msra.mxu0 0.0
    %1054 = vmatpush.msra.mxu0 0.0
    %1055 = vmatpush.msra.mxu0 0.0
    %1056 = vmatpush.msra.mxu0 0.0
    %1057 = vmatpush.msra.mxu0 0.0
    %1058 = vmatpush.msra.mxu0 %v1041
    %1059 = vmatmul.f32.gmra.mxu0 %v1037
    %v1060 = vpop.f32.mrf.mxu0
    %v1061 = vadd.f32 0.0, %v1060
    %1062 = vdwg.mxu0
    %v1063 = vmul.f32 %v1061, %v1033
    %v1065 = vperm.slane %v1017, 0
    %v1068 = vsel %vm228, %v1063, 0
    %1070 = vmatpush.msra.mxu0 0.0
    %1071 = vmatpush.msra.mxu0 0.0
    %1072 = vmatpush.msra.mxu0 0.0
    %1073 = vmatpush.msra.mxu0 0.0
    %1074 = vmatpush.msra.mxu0 0.0
    %1075 = vmatpush.msra.mxu0 0.0
    %1076 = vmatpush.msra.mxu0 0.0
    %1077 = vmatpush.msra.mxu0 0.0
    %1078 = vmatpush.msra.mxu0 0.0
    %1079 = vmatpush.msra.mxu0 0.0
    %1080 = vmatpush.msra.mxu0 0.0
    %1081 = vmatpush.msra.mxu0 0.0
    %1082 = vmatpush.msra.mxu0 %v1016
    %1083 = vmatpush.msra.mxu0 %v1015
    %1084 = vmatpush.msra.mxu0 %v1014
    %1085 = vmatpush.msra.mxu0 %v1013
    %1086 = vmatmul.f32.gmra.mxu0 %v1068
    %v1087 = vpop.f32.mrf.mxu0
    %v1088 = vadd.f32 %v1065, %v1087
    %1089 = vdwg.mxu0
    %v1090 = vmax.f32 %v1088, 0.0
    %v1091 = vsel %vm930, %v1090, 0.0
    %v1092 = vrot.slane %v1091, 4
    %v1093 = vadd.f32 %v1091, %v1092
    %v1094 = vrot.slane %v1093, 2
    %v1095 = vadd.f32 %v1093, %v1094
    %v1096 = vrot.slane %v1095, 1
    %v1097 = vadd.f32 %v1095, %v1096
    %v1098 = vmul.f32 %v1097, %v1002
    %v1099 = vadd.f32 %v1004, %v1098
    %v1100 = vsel %vm930, %v1090, -inf
    %v1101 = vrot.slane %v1100, 4
    %v1102 = vmax.f32 %v1100, %v1101
    %v1103 = vrot.slane %v1102, 2
    %v1104 = vmax.f32 %v1102, %v1103
    %v1105 = vrot.slane %v1104, 1
    %v1106 = vmax.f32 %v1104, %v1105
    %v1107 = vadd.f32 %v1012, %v1106
    %v1108 = vld [vmem:[%s12] sm:$0xff]
    %v1109 = vld [vmem:[%s12 + $0x8] sm:$0xff]
    %v1110 = vld [vmem:[%s12 + $0x10] sm:$0xff]
    %v1111 = vld [vmem:[%s12 + $0x18] sm:$0xff]
    %v1112 = vld [vmem:[%s12 + $0x20] sm:$0xff]
    %v1113 = vld [vmem:[%s12 + $0x28] sm:$0xff]
    %v1114 = vld [vmem:[%s12 + $0x30] sm:$0xff]
    %v1115 = vld [vmem:[%s12 + $0x38] sm:$0xff]
    %v1117 = vsel %vm228, %v1107, 0
    %1119 = vmatpush.msra.mxu0 0.0
    %1120 = vmatpush.msra.mxu0 0.0
    %1121 = vmatpush.msra.mxu0 0.0
    %1122 = vmatpush.msra.mxu0 0.0
    %1123 = vmatpush.msra.mxu0 0.0
    %1124 = vmatpush.msra.mxu0 0.0
    %1125 = vmatpush.msra.mxu0 0.0
    %1126 = vmatpush.msra.mxu0 0.0
    %1127 = vmatpush.msra.mxu0 0.0
    %1128 = vmatpush.msra.mxu0 0.0
    %1129 = vmatpush.msra.mxu0 0.0
    %1130 = vmatpush.msra.mxu0 0.0
    %1131 = vmatpush.msra.mxu0 %v1115
    %1132 = vmatpush.msra.mxu0 %v1114
    %1133 = vmatpush.msra.mxu0 %v1113
    %1134 = vmatpush.msra.mxu0 %v1112
    %1135 = vmatmul.f32.gmra.mxu0 %v1117
    %v1136 = vpop.f32.mrf.mxu0
    %v1137 = vadd.f32 0.0, %v1136
    %1138 = vdwg.mxu0
    %v1140 = vsel %vm228, %v1099, 0
    %1142 = vmatpush.msra.mxu0 0.0
    %1143 = vmatpush.msra.mxu0 0.0
    %1144 = vmatpush.msra.mxu0 0.0
    %1145 = vmatpush.msra.mxu0 0.0
    %1146 = vmatpush.msra.mxu0 0.0
    %1147 = vmatpush.msra.mxu0 0.0
    %1148 = vmatpush.msra.mxu0 0.0
    %1149 = vmatpush.msra.mxu0 0.0
    %1150 = vmatpush.msra.mxu0 0.0
    %1151 = vmatpush.msra.mxu0 0.0
    %1152 = vmatpush.msra.mxu0 0.0
    %1153 = vmatpush.msra.mxu0 0.0
    %1154 = vmatpush.msra.mxu0 %v1111
    %1155 = vmatpush.msra.mxu0 %v1110
    %1156 = vmatpush.msra.mxu0 %v1109
    %1157 = vmatpush.msra.mxu0 %v1108
    %1158 = vmatmul.f32.gmra.mxu0 %v1140
    %v1159 = vpop.f32.mrf.mxu0
    %v1160 = vadd.f32 %v1137, %v1159
    %1161 = vdwg.mxu0
    %v1162 = vld [vmem:[%s13] sm:$0x1]
    %v1163 = vadd.f32 %v1160, %v1162
    %v1164 = vmax.f32 %v1163, 0.0
    %v1165 = vld [vmem:[%s14] sm:$0xff]
    %v1166 = vld [vmem:[%s14 + $0x8] sm:$0xff]
    %v1167 = vld [vmem:[%s14 + $0x10] sm:$0xff]
    %v1168 = vld [vmem:[%s14 + $0x18] sm:$0xff]
    %v1169 = vld [vmem:[%s15] sm:$0x1]
    %v1171 = vsel %vm228, %v1164, 0
    %1173 = vmatpush.msra.mxu0 0.0
    %1174 = vmatpush.msra.mxu0 0.0
    %1175 = vmatpush.msra.mxu0 0.0
    %1176 = vmatpush.msra.mxu0 0.0
    %1177 = vmatpush.msra.mxu0 0.0
    %1178 = vmatpush.msra.mxu0 0.0
    %1179 = vmatpush.msra.mxu0 0.0
    %1180 = vmatpush.msra.mxu0 0.0
    %1181 = vmatpush.msra.mxu0 0.0
    %1182 = vmatpush.msra.mxu0 0.0
    %1183 = vmatpush.msra.mxu0 0.0
    %1184 = vmatpush.msra.mxu0 0.0
    %1185 = vmatpush.msra.mxu0 %v1168
    %1186 = vmatpush.msra.mxu0 %v1167
    %1187 = vmatpush.msra.mxu0 %v1166
    %1188 = vmatpush.msra.mxu0 %v1165
    %1189 = vmatmul.f32.gmra.mxu0 %v1171
    %v1190 = vpop.f32.mrf.mxu0
    %v1191 = vadd.f32 %v1169, %v1190
    %1192 = vdwg.mxu0
    %v1193 = vmax.f32 %v1191, 0.0
    %v1194 = vld [vmem:[%s16] sm:$0xff]
    %v1195 = vld [vmem:[%s16 + $0x8] sm:$0xff]
    %v1196 = vld [vmem:[%s17] sm:$0x1]
    %v1198 = vsel %vm62, %v1193, 0
    %1200 = vmatpush.msra.mxu0 0.0
    %1201 = vmatpush.msra.mxu0 0.0
    %1202 = vmatpush.msra.mxu0 0.0
    %1203 = vmatpush.msra.mxu0 0.0
    %1204 = vmatpush.msra.mxu0 0.0
    %1205 = vmatpush.msra.mxu0 0.0
    %1206 = vmatpush.msra.mxu0 0.0
    %1207 = vmatpush.msra.mxu0 0.0
    %1208 = vmatpush.msra.mxu0 0.0
    %1209 = vmatpush.msra.mxu0 0.0
    %1210 = vmatpush.msra.mxu0 0.0
    %1211 = vmatpush.msra.mxu0 0.0
    %1212 = vmatpush.msra.mxu0 0.0
    %1213 = vmatpush.msra.mxu0 0.0
    %1214 = vmatpush.msra.mxu0 %v1195
    %1215 = vmatpush.msra.mxu0 %v1194
    %1216 = vmatmul.f32.gmra.mxu0 %v1198
    %v1217 = vpop.f32.mrf.mxu0
    %v1218 = vadd.f32 %v1196, %v1217
    %1219 = vdwg.mxu0
    %vm1220 = vcmask 24576
    %v1221 = vsel %vm1220, %v1218, -inf
    %1222 = vmax.xlane.f32.xlu0 %v1221
    %v1223 = vpop.xlane.xlu0 %1222
    %v1224 = vsub.f32 %v1218, %v1223
    %v1225 = vmul.f32 %v1224, 1.442695
    %v1226 = vpow.pop %v1225
    %v1227 = vsel %vm1220, %v1226, 0.0
    %1228 = vadd.xlane.f32.xlu0 %v1227
    %v1229 = vpop.xlane.xlu0 %1228
    %v1230 = vlog2.pop %v1229
    %v1231 = vmul.f32 %v1230, 0.6931472
    %v1232 = vsub.f32 %v1224, %v1231
    %1233 = vst.msk [vmem:[#allocation4] sm:$0x1] %vm1220, %v1232
    // Predicated region
    $region74: #{simple_model_forward.1} parent=1 // pred_check
      _
    $region75: #{simple_model_forward.1} parent=1 // pred_check_branch
      %1235 = sbr.rel (0) target = $region77
    $region76: #{simple_model_forward.1} parent=1 // pred_region
      %1237 = vsyncadd [#allocation5], 0
      %s1239 = sshll.u32 [#allocation4], 4
      %s1240 = int_to_ptr.vmem [resolvable:$true] %s1239
      %s1241 = sshll.u32 %s18, 4
      %s1242 = int_to_ptr.hbm [resolvable:$true] %s1241
      %1244 = dma.vmem_to_hbm [thread:$0]  %s1240, 16, %s1242, [#allocation5]
    $region77: #{simple_model_forward.1} parent=1 // pred_fallthru
      _
    // Predicated region
    $region78: #{simple_model_forward.1} parent=1 // pred_check
      _
    $region79: #{simple_model_forward.1} parent=1 // pred_check_branch
      %1246 = sbr.rel (0) target = $region81
    $region80: #{simple_model_forward.1} parent=1 // pred_region
      %1248 = dma.done [#allocation5], 16
    $region81: #{simple_model_forward.1} parent=1 // pred_fallthru
      _
    %1249 = vsyncpa [#allocation5], 1

</llo_original>
